<compile_context>
chip_gen: v6e
topology: v6e:2x2x1
jax: 0.10.0
libtpu: 0.0.40
codegen_flags: <defaults>
</compile_context>

<pallas_src>
import functools

import jax
import jax.numpy as jnp
from jax import lax
from jax.experimental import pallas as pl
from jax.experimental.pallas import tpu as pltpu


def _cdiv(a, b):
    return -(-a // b)


def _round_up(x, m):
    return _cdiv(x, m) * m


def _default_block_b():
    """v5e's MXU is 4x128x128 (M=128 already fills it); v6e/v7x prefer M=256."""
    try:
        kind = jax.devices()[0].device_kind.lower()
        if "v5" in kind and ("lite" in kind or "5e" in kind):
            return 128
    except Exception:
        pass
    return 256


def _vmem_limit_bytes():
    """Per-chip VMEM budget; never request anywhere near full physical capacity."""
    try:
        cap = int(pltpu.get_tpu_info().vmem_capacity_bytes)
        return min(cap * 3 // 4, 96 << 20)      # 48 MiB on v7x (64 MiB core), 96 MiB on v5e/v6e
    except Exception:
        return 48 << 20                          # conservative fallback, safe on all chips


def _query_kernel(z_ref, cbt_neg2t_ref, cb_ref, y_sq_ref, zq_ref, maps_ref, *, depth):
    z = z_ref[...].astype(jnp.float32)           # (tB, d)   this grid step's batch tile
    cbt_neg2t = cbt_neg2t_ref[...]               # (d, Np)   bf16, already scaled by -2
    cb = cb_ref[...]                             # (Np, d)   bf16 gather source
    y_sq = y_sq_ref[...]                         # (1, Np)   f32 (+inf on padded columns)

    tB, _ = z.shape
    Np = cb.shape[0]
    lane_idx = lax.broadcasted_iota(jnp.int32, (tB, Np), 1)

    residual = z
    # depth is small & static -> unrolled Python loop inside the kernel body.
    for i in range(depth):
        # dist(x, y) = sum(x^2, 1, keepdim) + sum(y^2, 1) - 2 * x @ y.T
        # (-2 is folded into cbt_neg2t; y_sq precomputed in the wrapper.)
        x_sq = jnp.sum(residual * residual, axis=1, keepdims=True)        # (tB, 1) f32
        cross = jnp.dot(residual.astype(jnp.bfloat16), cbt_neg2t,         # (tB, Np) MXU
                        preferred_element_type=jnp.float32)               #   f32 accumulation
        dist = x_sq + y_sq + cross                                        # (tB, Np) f32
        maps_ref[i] = dist.astype(maps_ref.dtype)

        # argmin over dim=1 (first index of the minimum), fully vectorized.
        min_val = jnp.min(dist, axis=1, keepdims=True)                    # (tB, 1)
        first_min = jnp.min(jnp.where(dist == min_val, lane_idx, Np),
                            axis=1, keepdims=True)                        # (tB, 1)
        one_hot = (lane_idx == first_min).astype(jnp.bfloat16)            # exact 0/1

        # einsum('bm,md->bd', one_hot, codebook) -- gather via bf16 MXU matmul.
        delta = jnp.dot(one_hot, cb, preferred_element_type=jnp.float32)  # (tB, d) f32
        residual = residual - delta

    # z_q == z - final residual (no per-step accumulator, no extra (tB, d) live value).
    zq_ref[...] = (z - residual).astype(zq_ref.dtype)


def query_module_forward(z, codebook, codebook_transform, depth, *,
                         block_b=None, maps_dtype=jnp.float32,
                         compute_dtype=jnp.bfloat16):
    """Pallas implementation of QueryModule.forward.

    Returns (z_q, maps) where maps is a stacked (depth, B, N) array; maps[i] matches the
    i-th element of the PyTorch module's list (stacked to avoid extra HBM copies).
    NOTE: z_q accumulates bf16-rounded codebook rows (codebook is cast to bf16 for the
    MXU gather), so it differs from a pure-f32 PyTorch path at bf16 precision.
    """
    B, d = z.shape
    N, _ = codebook.shape

    # ---- operand prep (paid once, outside the kernel) --------------------------------
    N_pad = _round_up(N, 128)                     # lane-dense (tB, N) ops + maps stores
    pad_n = N_pad - N

    cbt_f32 = codebook_transform.astype(jnp.float32)
    y_sq = jnp.sum(cbt_f32 * cbt_f32, axis=1)[None, :]                    # (1, N) f32
    cbt_neg2t = (-2.0 * jnp.transpose(cbt_f32)).astype(compute_dtype)     # (d, N) bf16
    cb = codebook.astype(compute_dtype)                                   # (N, d) bf16

    if pad_n:
        y_sq = jnp.pad(y_sq, ((0, 0), (0, pad_n)), constant_values=float("inf"))
        cbt_neg2t = jnp.pad(cbt_neg2t, ((0, 0), (0, pad_n)))
        cb = jnp.pad(cb, ((0, pad_n), (0, 0)))

    # ---- batch tiling: generation- and VMEM-aware ------------------------------------
    if block_b is None:
        block_b = _default_block_b()
    vmem_limit = _vmem_limit_bytes()
    budget = max(vmem_limit - (6 << 20), 8 << 20)

    maps_bytes = jnp.dtype(maps_dtype).itemsize
    # Resident codebook operands (worst case: double-buffered).
    fixed = 2 * (d * N_pad * 2 + N_pad * d * 2 + N_pad * 4)
    # Per batch-row VMEM: z tile + z_q tile (double-buffered), maps tile (double-buffered,
    # dominant), plus headroom for (tB, N)/(tB, d) live values inside the kernel.
    per_row = (2 * d * 4 + 2 * d * 4
               + 2 * depth * N_pad * maps_bytes
               + 4 * N_pad * 4 + 4 * d * 4)
    tB_fit = 8
    if budget > fixed:
        tB_fit = max(8, ((budget - fixed) // per_row) // 8 * 8)

    tB = min(block_b, _round_up(B, 8), tB_fit)
    if B >= 16:
        # >= 2 grid steps so the "parallel" batch axis can shard across v7x's two TCs.
        tB = min(tB, _round_up(_cdiv(B, 2), 8))
    tB = max(tB, 8)

    num_b = _cdiv(B, tB)
    tB = _round_up(_cdiv(B, num_b), 8)            # minimize padding at fixed step count
    B_pad = num_b * tB
    z_in = z if B_pad == B else jnp.pad(z, ((0, B_pad - B), (0, 0)))

    kernel = functools.partial(_query_kernel, depth=depth)

    def _call(single_buffer_codebook):
        def cspec(shape):
            idx = lambda i: (0,) * len(shape)
            if single_buffer_codebook:
                # Constant index_map -> a second buffer is pure VMEM waste.
                return pl.BlockSpec(shape, idx, pipeline_mode=pl.Buffered(1))
            return pl.BlockSpec(shape, idx)

        return pl.pallas_call(
            kernel,
            out_shape=(
                jax.ShapeDtypeStruct((B_pad, d), jnp.float32),
                jax.ShapeDtypeStruct((depth, B_pad, N_pad), maps_dtype),
            ),
            grid=(num_b,),
            in_specs=[
                pl.BlockSpec((tB, d), lambda i: (i, 0)),   # z batch tile
                cspec((d, N_pad)),                         # -2 * transform^T, resident
                cspec((N_pad, d)),                         # codebook, resident
                cspec((1, N_pad)),                         # y_sq, resident
            ],
            out_specs=(
                pl.BlockSpec((tB, d), lambda i: (i, 0)),
                pl.BlockSpec((depth, tB, N_pad), lambda i: (0, i, 0)),
            ),
            compiler_params=pltpu.CompilerParams(
                dimension_semantics=("parallel",),         # megacore-shard the batch axis
                vmem_limit_bytes=vmem_limit,
            ),
        )(z_in, cbt_neg2t, cb, y_sq)

    try:
        z_q, maps = _call(True)
    except Exception:
        # pipeline_mode=pl.Buffered(1) not supported on this jax/libtpu combo:
        # fall back to default (double-buffered) codebook residency.
        z_q, maps = _call(False)

    if B_pad != B:
        z_q = z_q[:B]
        maps = maps[:, :B]
    if N_pad != N:
        maps = maps[..., :N]
    return z_q, maps


def _reference_forward(z, codebook, codebook_transform, depth,
                       compute_dtype=jnp.bfloat16):
    """Pure-JAX reference with the same numerics as the kernel
    (bf16 matmul operands, f32 accumulation, f32 y_sq), mirroring the PyTorch code."""
    cbt_f32 = codebook_transform.astype(jnp.float32)
    cbt_c = cbt_f32.astype(compute_dtype)
    cb_c = codebook.astype(compute_dtype)
    y_sq = jnp.sum(cbt_f32 * cbt_f32, axis=1)
    residual = z.astype(jnp.float32)
    z_q = jnp.zeros_like(residual)
    maps = []
    for _ in range(depth):
        x_sq = jnp.sum(residual ** 2, axis=1, keepdims=True)
        cross = jnp.dot(residual.astype(compute_dtype), cbt_c.T,
                        preferred_element_type=jnp.float32)
        dist = x_sq + y_sq - 2.0 * cross
        maps.append(dist)
        pred = jnp.argmin(dist, axis=1)
        delta = cb_c[pred].astype(jnp.float32)
        z_q = z_q + delta
        residual = residual - delta
    return z_q, maps


if __name__ == "__main__":
    key = jax.random.PRNGKey(0)
    k_z, k_cb = jax.random.split(key)

    B, d, N, depth = 8, 128, 256, 3

    z = jax.random.normal(k_z, (B, d), dtype=jnp.float32)
    codebook = jax.random.normal(k_cb, (N, d), dtype=jnp.float32)
    # The PyTorch module leaves codebook_transform to be assigned externally;
    # use the identity transform (codebook_transform == codebook) here.
    codebook_transform = codebook

    z_q, maps = query_module_forward(z, codebook, codebook_transform, depth)
    z_q = jax.block_until_ready(z_q)
    maps = jax.block_until_ready(maps)

    # 1) Self-consistency: re-derive z_q from the kernel's own distance maps with the
    #    module's argmin -> gather -> accumulate semantics (fp-roundoff tolerance only).
    cb_bf16 = codebook.astype(jnp.bfloat16)
    zq_rederived = jnp.zeros_like(z)
    for i in range(depth):
        pred = jnp.argmin(maps[i], axis=1)
        zq_rederived = zq_rederived + cb_bf16[pred].astype(jnp.float32)
    assert jnp.allclose(zq_rederived, z_q, atol=1e-4, rtol=1e-5)

    # 2) Distance maps match the matched-numerics JAX reference.
    z_q_ref, maps_ref = _reference_forward(z, codebook, codebook_transform, depth)
    for i in range(depth):
        assert jnp.allclose(maps[i], maps_ref[i], atol=1e-1, rtol=1e-2)

    # 3) If no near-tied argmin (the generic case), z_q matches the reference too.
    same_preds = all(bool(jnp.all(jnp.argmin(maps[i], axis=1) ==
                                  jnp.argmin(maps_ref[i], axis=1)))
                     for i in range(depth))
    if same_preds:
        assert jnp.allclose(z_q, z_q_ref, atol=1e-3, rtol=1e-3)

    print("KERNEL_OK")
</pallas_src>

<mosaic_0001>
module attributes {stable_mosaic.version = 11 : i64} {
  func.func @_query_kernel(%arg0: i32, %arg1: memref<8x128xf32, #tpu.memory_space<vmem>>, %arg2: memref<128x256xbf16, #tpu.memory_space<vmem>>, %arg3: memref<256x128xbf16, #tpu.memory_space<vmem>>, %arg4: memref<1x256xf32, #tpu.memory_space<vmem>>, %arg5: memref<8x128xf32, #tpu.memory_space<vmem>>, %arg6: memref<3x8x256xf32, #tpu.memory_space<vmem>>) attributes {dimension_semantics = [#tpu.dimension_semantics<parallel>], iteration_bounds = array<i64: 1>, scalar_prefetch = 0 : i64, scratch_operands = 0 : i64, tpu.core_type = #tpu.core_type<tc>, window_params = [{transform_indices = @transform_0, window_bounds = array<i64: 8, 128>}, {pipeline_mode = #tpu.pipeline_mode<synchronous>, transform_indices = @transform_1, window_bounds = array<i64: 128, 256>}, {pipeline_mode = #tpu.pipeline_mode<synchronous>, transform_indices = @transform_2, window_bounds = array<i64: 256, 128>}, {pipeline_mode = #tpu.pipeline_mode<synchronous>, transform_indices = @transform_3, window_bounds = array<i64: 1, 256>}, {transform_indices = @transform_4, window_bounds = array<i64: 8, 128>}, {transform_indices = @transform_5, window_bounds = array<i64: 3, 8, 256>}]} {
    %c0 = arith.constant 0 : index
    %c0_0 = arith.constant 0 : index
    %0 = vector.load %arg1[%c0, %c0_0] : memref<8x128xf32, #tpu.memory_space<vmem>>, vector<8x128xf32>
    %c0_1 = arith.constant 0 : index
    %c0_2 = arith.constant 0 : index
    %1 = vector.load %arg2[%c0_1, %c0_2] : memref<128x256xbf16, #tpu.memory_space<vmem>>, vector<128x256xbf16>
    %c0_3 = arith.constant 0 : index
    %c0_4 = arith.constant 0 : index
    %2 = vector.load %arg3[%c0_3, %c0_4] : memref<256x128xbf16, #tpu.memory_space<vmem>>, vector<256x128xbf16>
    %c0_5 = arith.constant 0 : index
    %c0_6 = arith.constant 0 : index
    %3 = vector.load %arg4[%c0_5, %c0_6] : memref<1x256xf32, #tpu.memory_space<vmem>>, vector<1x256xf32>
    %4 = tpu.iota {dimensions = array<i32: 1>} : vector<8x256xi32>
    %5 = arith.mulf %0, %0 : vector<8x128xf32>
    %cst = arith.constant dense<0.000000e+00> : vector<8xf32>
    %6 = vector.multi_reduction <add>, %5, %cst [1] : vector<8x128xf32> to vector<8xf32>
    %7 = vector.shape_cast %6 : vector<8xf32> to vector<8x1xf32>
    %8 = arith.truncf %0 : vector<8x128xf32> to vector<8x128xbf16>
    %cst_7 = arith.constant dense<0.000000e+00> : vector<8x256xf32>
    %9 = tpu.matmul %8, %1, %cst_7 {dimension_numbers = #tpu.dot_dimension_numbers<[1], [0], [0], [1], [0, 0, 1, 1], [], []>} : vector<8x128xbf16>, vector<128x256xbf16>, vector<8x256xf32> -> vector<8x256xf32>
    %10 = vector.broadcast %7 : vector<8x1xf32> to vector<8x256xf32>
    %11 = vector.broadcast %3 : vector<1x256xf32> to vector<8x256xf32>
    %12 = arith.addf %10, %11 : vector<8x256xf32>
    %13 = arith.addf %12, %9 : vector<8x256xf32>
    %c0_8 = arith.constant 0 : index
    %c0_9 = arith.constant 0 : index
    %c0_10 = arith.constant 0 : index
    %14 = vector.load %arg6[%c0_8, %c0_9, %c0_10] : memref<3x8x256xf32, #tpu.memory_space<vmem>>, vector<1x8x256xf32>
    %15 = vector.shape_cast %14 : vector<1x8x256xf32> to vector<8x256xf32>
    %16 = vector.shape_cast %13 : vector<8x256xf32> to vector<1x8x256xf32>
    tpu.vector_store %arg6[%c0_8, %c0_9, %c0_10], %16 {strides = array<i32>} : memref<3x8x256xf32, #tpu.memory_space<vmem>>, vector<1x8x256xf32>,
    %cst_11 = arith.constant dense<0x7F800000> : vector<8xf32>
    %17 = vector.multi_reduction <minimumf>, %13, %cst_11 [1] : vector<8x256xf32> to vector<8xf32>
    %18 = vector.shape_cast %17 : vector<8xf32> to vector<8x1xf32>
    %19 = vector.broadcast %18 : vector<8x1xf32> to vector<8x256xf32>
    %20 = arith.cmpf oeq, %13, %19 : vector<8x256xf32>
    %c256_i32 = arith.constant 256 : i32
    %21 = vector.broadcast %c256_i32 : i32 to vector<8x256xi32>
    %22 = arith.select %20, %4, %21 : vector<8x256xi1>, vector<8x256xi32>
    %cst_12 = arith.constant dense<2147483647> : vector<8xi32>
    %23 = vector.multi_reduction <minsi>, %22, %cst_12 [1] : vector<8x256xi32> to vector<8xi32>
    %24 = vector.shape_cast %23 : vector<8xi32> to vector<8x1xi32>
    %25 = vector.broadcast %24 : vector<8x1xi32> to vector<8x256xi32>
    %26 = arith.cmpi eq, %4, %25 : vector<8x256xi32>
    %27 = arith.extui %26 : vector<8x256xi1> to vector<8x256xi32>
    %28 = arith.sitofp %27 : vector<8x256xi32> to vector<8x256xf32>
    %29 = arith.truncf %28 : vector<8x256xf32> to vector<8x256xbf16>
    %cst_13 = arith.constant dense<0.000000e+00> : vector<8x128xf32>
    %30 = tpu.matmul %29, %2, %cst_13 {dimension_numbers = #tpu.dot_dimension_numbers<[1], [0], [0], [1], [0, 0, 1, 1], [], []>} : vector<8x256xbf16>, vector<256x128xbf16>, vector<8x128xf32> -> vector<8x128xf32>
    %31 = arith.subf %0, %30 : vector<8x128xf32>
    %32 = arith.mulf %31, %31 : vector<8x128xf32>
    %cst_14 = arith.constant dense<0.000000e+00> : vector<8xf32>
    %33 = vector.multi_reduction <add>, %32, %cst_14 [1] : vector<8x128xf32> to vector<8xf32>
    %34 = vector.shape_cast %33 : vector<8xf32> to vector<8x1xf32>
    %35 = arith.truncf %31 : vector<8x128xf32> to vector<8x128xbf16>
    %cst_15 = arith.constant dense<0.000000e+00> : vector<8x256xf32>
    %36 = tpu.matmul %35, %1, %cst_15 {dimension_numbers = #tpu.dot_dimension_numbers<[1], [0], [0], [1], [0, 0, 1, 1], [], []>} : vector<8x128xbf16>, vector<128x256xbf16>, vector<8x256xf32> -> vector<8x256xf32>
    %37 = vector.broadcast %34 : vector<8x1xf32> to vector<8x256xf32>
    %38 = vector.broadcast %3 : vector<1x256xf32> to vector<8x256xf32>
    %39 = arith.addf %37, %38 : vector<8x256xf32>
    %40 = arith.addf %39, %36 : vector<8x256xf32>
    %c1 = arith.constant 1 : index
    %c0_16 = arith.constant 0 : index
    %c0_17 = arith.constant 0 : index
    %41 = vector.load %arg6[%c1, %c0_16, %c0_17] : memref<3x8x256xf32, #tpu.memory_space<vmem>>, vector<1x8x256xf32>
    %42 = vector.shape_cast %41 : vector<1x8x256xf32> to vector<8x256xf32>
    %43 = vector.shape_cast %40 : vector<8x256xf32> to vector<1x8x256xf32>
    tpu.vector_store %arg6[%c1, %c0_16, %c0_17], %43 {strides = array<i32>} : memref<3x8x256xf32, #tpu.memory_space<vmem>>, vector<1x8x256xf32>,
    %cst_18 = arith.constant dense<0x7F800000> : vector<8xf32>
    %44 = vector.multi_reduction <minimumf>, %40, %cst_18 [1] : vector<8x256xf32> to vector<8xf32>
    %45 = vector.shape_cast %44 : vector<8xf32> to vector<8x1xf32>
    %46 = vector.broadcast %45 : vector<8x1xf32> to vector<8x256xf32>
    %47 = arith.cmpf oeq, %40, %46 : vector<8x256xf32>
    %c256_i32_19 = arith.constant 256 : i32
    %48 = vector.broadcast %c256_i32_19 : i32 to vector<8x256xi32>
    %49 = arith.select %47, %4, %48 : vector<8x256xi1>, vector<8x256xi32>
    %cst_20 = arith.constant dense<2147483647> : vector<8xi32>
    %50 = vector.multi_reduction <minsi>, %49, %cst_20 [1] : vector<8x256xi32> to vector<8xi32>
    %51 = vector.shape_cast %50 : vector<8xi32> to vector<8x1xi32>
    %52 = vector.broadcast %51 : vector<8x1xi32> to vector<8x256xi32>
    %53 = arith.cmpi eq, %4, %52 : vector<8x256xi32>
    %54 = arith.extui %53 : vector<8x256xi1> to vector<8x256xi32>
    %55 = arith.sitofp %54 : vector<8x256xi32> to vector<8x256xf32>
    %56 = arith.truncf %55 : vector<8x256xf32> to vector<8x256xbf16>
    %cst_21 = arith.constant dense<0.000000e+00> : vector<8x128xf32>
    %57 = tpu.matmul %56, %2, %cst_21 {dimension_numbers = #tpu.dot_dimension_numbers<[1], [0], [0], [1], [0, 0, 1, 1], [], []>} : vector<8x256xbf16>, vector<256x128xbf16>, vector<8x128xf32> -> vector<8x128xf32>
    %58 = arith.subf %31, %57 : vector<8x128xf32>
    %59 = arith.mulf %58, %58 : vector<8x128xf32>
    %cst_22 = arith.constant dense<0.000000e+00> : vector<8xf32>
    %60 = vector.multi_reduction <add>, %59, %cst_22 [1] : vector<8x128xf32> to vector<8xf32>
    %61 = vector.shape_cast %60 : vector<8xf32> to vector<8x1xf32>
    %62 = arith.truncf %58 : vector<8x128xf32> to vector<8x128xbf16>
    %cst_23 = arith.constant dense<0.000000e+00> : vector<8x256xf32>
    %63 = tpu.matmul %62, %1, %cst_23 {dimension_numbers = #tpu.dot_dimension_numbers<[1], [0], [0], [1], [0, 0, 1, 1], [], []>} : vector<8x128xbf16>, vector<128x256xbf16>, vector<8x256xf32> -> vector<8x256xf32>
    %64 = vector.broadcast %61 : vector<8x1xf32> to vector<8x256xf32>
    %65 = vector.broadcast %3 : vector<1x256xf32> to vector<8x256xf32>
    %66 = arith.addf %64, %65 : vector<8x256xf32>
    %67 = arith.addf %66, %63 : vector<8x256xf32>
    %c2 = arith.constant 2 : index
    %c0_24 = arith.constant 0 : index
    %c0_25 = arith.constant 0 : index
    %68 = vector.load %arg6[%c2, %c0_24, %c0_25] : memref<3x8x256xf32, #tpu.memory_space<vmem>>, vector<1x8x256xf32>
    %69 = vector.shape_cast %68 : vector<1x8x256xf32> to vector<8x256xf32>
    %70 = vector.shape_cast %67 : vector<8x256xf32> to vector<1x8x256xf32>
    tpu.vector_store %arg6[%c2, %c0_24, %c0_25], %70 {strides = array<i32>} : memref<3x8x256xf32, #tpu.memory_space<vmem>>, vector<1x8x256xf32>,
    %cst_26 = arith.constant dense<0x7F800000> : vector<8xf32>
    %71 = vector.multi_reduction <minimumf>, %67, %cst_26 [1] : vector<8x256xf32> to vector<8xf32>
    %72 = vector.shape_cast %71 : vector<8xf32> to vector<8x1xf32>
    %73 = vector.broadcast %72 : vector<8x1xf32> to vector<8x256xf32>
    %74 = arith.cmpf oeq, %67, %73 : vector<8x256xf32>
    %c256_i32_27 = arith.constant 256 : i32
    %75 = vector.broadcast %c256_i32_27 : i32 to vector<8x256xi32>
    %76 = arith.select %74, %4, %75 : vector<8x256xi1>, vector<8x256xi32>
    %cst_28 = arith.constant dense<2147483647> : vector<8xi32>
    %77 = vector.multi_reduction <minsi>, %76, %cst_28 [1] : vector<8x256xi32> to vector<8xi32>
    %78 = vector.shape_cast %77 : vector<8xi32> to vector<8x1xi32>
    %79 = vector.broadcast %78 : vector<8x1xi32> to vector<8x256xi32>
    %80 = arith.cmpi eq, %4, %79 : vector<8x256xi32>
    %81 = arith.extui %80 : vector<8x256xi1> to vector<8x256xi32>
    %82 = arith.sitofp %81 : vector<8x256xi32> to vector<8x256xf32>
    %83 = arith.truncf %82 : vector<8x256xf32> to vector<8x256xbf16>
    %cst_29 = arith.constant dense<0.000000e+00> : vector<8x128xf32>
    %84 = tpu.matmul %83, %2, %cst_29 {dimension_numbers = #tpu.dot_dimension_numbers<[1], [0], [0], [1], [0, 0, 1, 1], [], []>} : vector<8x256xbf16>, vector<256x128xbf16>, vector<8x128xf32> -> vector<8x128xf32>
    %85 = arith.subf %58, %84 : vector<8x128xf32>
    %86 = arith.subf %0, %85 : vector<8x128xf32>
    %c0_30 = arith.constant 0 : index
    %c0_31 = arith.constant 0 : index
    %87 = vector.load %arg5[%c0_30, %c0_31] : memref<8x128xf32, #tpu.memory_space<vmem>>, vector<8x128xf32>
    tpu.vector_store %arg5[%c0_30, %c0_31], %86 {strides = array<i32>} : memref<8x128xf32, #tpu.memory_space<vmem>>, vector<8x128xf32>,
    return
  }
  func.func @transform_0(%arg0: i32) -> (i32, i32) {
    %c0_i32 = arith.constant 0 : i32
    %c0_i32_0 = arith.constant 0 : i32
    return %arg0, %c0_i32 : i32, i32
  }
  func.func @transform_1(%arg0: i32) -> (i32, i32) {
    %c0_i32 = arith.constant 0 : i32
    %c0_i32_0 = arith.constant 0 : i32
    %c0_i32_1 = arith.constant 0 : i32
    return %c0_i32, %c0_i32_0 : i32, i32
  }
  func.func @transform_2(%arg0: i32) -> (i32, i32) {
    %c0_i32 = arith.constant 0 : i32
    %c0_i32_0 = arith.constant 0 : i32
    %c0_i32_1 = arith.constant 0 : i32
    return %c0_i32, %c0_i32_0 : i32, i32
  }
  func.func @transform_3(%arg0: i32) -> (i32, i32) {
    %c0_i32 = arith.constant 0 : i32
    %c0_i32_0 = arith.constant 0 : i32
    %c0_i32_1 = arith.constant 0 : i32
    return %c0_i32, %c0_i32_0 : i32, i32
  }
  func.func @transform_4(%arg0: i32) -> (i32, i32) {
    %c0_i32 = arith.constant 0 : i32
    %c0_i32_0 = arith.constant 0 : i32
    return %arg0, %c0_i32 : i32, i32
  }
  func.func @transform_5(%arg0: i32) -> (i32, i32, i32) {
    %c0_i32 = arith.constant 0 : i32
    %c0_i32_0 = arith.constant 0 : i32
    %c0_i32_1 = arith.constant 0 : i32
    return %c0_i32, %arg0, %c0_i32_0 : i32, i32, i32
  }
}

module attributes {stable_mosaic.version = 11 : i64} {
  func.func @_query_kernel(%arg0: i32, %arg1: memref<8x128xf32, #tpu.memory_space<vmem>>, %arg2: memref<128x256xbf16, #tpu.memory_space<vmem>>, %arg3: memref<256x128xbf16, #tpu.memory_space<vmem>>, %arg4: memref<1x256xf32, #tpu.memory_space<vmem>>, %arg5: memref<8x128xf32, #tpu.memory_space<vmem>>, %arg6: memref<3x8x256xf32, #tpu.memory_space<vmem>>) attributes {dimension_semantics = [#tpu.dimension_semantics<parallel>], iteration_bounds = array<i64: 1>, scalar_prefetch = 0 : i64, scratch_operands = 0 : i64, tpu.core_type = #tpu.core_type<tc>, window_params = [{transform_indices = @transform_0, window_bounds = array<i64: 8, 128>}, {pipeline_mode = #tpu.pipeline_mode<synchronous>, transform_indices = @transform_1, window_bounds = array<i64: 128, 256>}, {pipeline_mode = #tpu.pipeline_mode<synchronous>, transform_indices = @transform_2, window_bounds = array<i64: 256, 128>}, {pipeline_mode = #tpu.pipeline_mode<synchronous>, transform_indices = @transform_3, window_bounds = array<i64: 1, 256>}, {transform_indices = @transform_4, window_bounds = array<i64: 8, 128>}, {transform_indices = @transform_5, window_bounds = array<i64: 3, 8, 256>}]} {
    %c0 = arith.constant 0 : index
    %c0_0 = arith.constant 0 : index
    %0 = vector.load %arg1[%c0, %c0_0] : memref<8x128xf32, #tpu.memory_space<vmem>>, vector<8x128xf32>
    %c0_1 = arith.constant 0 : index
    %c0_2 = arith.constant 0 : index
    %1 = vector.load %arg2[%c0_1, %c0_2] : memref<128x256xbf16, #tpu.memory_space<vmem>>, vector<128x256xbf16>
    %c0_3 = arith.constant 0 : index
    %c0_4 = arith.constant 0 : index
    %2 = vector.load %arg3[%c0_3, %c0_4] : memref<256x128xbf16, #tpu.memory_space<vmem>>, vector<256x128xbf16>
    %c0_5 = arith.constant 0 : index
    %c0_6 = arith.constant 0 : index
    %3 = vector.load %arg4[%c0_5, %c0_6] : memref<1x256xf32, #tpu.memory_space<vmem>>, vector<1x256xf32>
    %4 = tpu.iota {dimensions = array<i32: 1>} : vector<8x256xi32>
    %5 = arith.mulf %0, %0 : vector<8x128xf32>
    %cst = arith.constant dense<0.000000e+00> : vector<8xf32>
    %6 = vector.multi_reduction <add>, %5, %cst [1] : vector<8x128xf32> to vector<8xf32>
    %7 = vector.shape_cast %6 : vector<8xf32> to vector<8x1xf32>
    %8 = arith.truncf %0 : vector<8x128xf32> to vector<8x128xbf16>
    %cst_7 = arith.constant dense<0.000000e+00> : vector<8x256xf32>
    %9 = tpu.matmul %8, %1, %cst_7 {dimension_numbers = #tpu.dot_dimension_numbers<[1], [0], [0], [1], [0, 0, 1, 1], [], []>} : vector<8x128xbf16>, vector<128x256xbf16>, vector<8x256xf32> -> vector<8x256xf32>
    %10 = vector.broadcast %7 : vector<8x1xf32> to vector<8x256xf32>
    %11 = vector.broadcast %3 : vector<1x256xf32> to vector<8x256xf32>
    %12 = arith.addf %10, %11 : vector<8x256xf32>
    %13 = arith.addf %12, %9 : vector<8x256xf32>
    %c0_8 = arith.constant 0 : index
    %c0_9 = arith.constant 0 : index
    %c0_10 = arith.constant 0 : index
    %14 = vector.load %arg6[%c0_8, %c0_9, %c0_10] : memref<3x8x256xf32, #tpu.memory_space<vmem>>, vector<1x8x256xf32>
    %15 = vector.shape_cast %14 : vector<1x8x256xf32> to vector<8x256xf32>
    %16 = vector.shape_cast %13 : vector<8x256xf32> to vector<1x8x256xf32>
    tpu.vector_store %arg6[%c0_8, %c0_9, %c0_10], %16 {strides = array<i32>} : memref<3x8x256xf32, #tpu.memory_space<vmem>>, vector<1x8x256xf32>,
    %cst_11 = arith.constant dense<0x7F800000> : vector<8xf32>
    %17 = vector.multi_reduction <minimumf>, %13, %cst_11 [1] : vector<8x256xf32> to vector<8xf32>
    %18 = vector.shape_cast %17 : vector<8xf32> to vector<8x1xf32>
    %19 = vector.broadcast %18 : vector<8x1xf32> to vector<8x256xf32>
    %20 = arith.cmpf oeq, %13, %19 : vector<8x256xf32>
    %c256_i32 = arith.constant 256 : i32
    %21 = vector.broadcast %c256_i32 : i32 to vector<8x256xi32>
    %22 = arith.select %20, %4, %21 : vector<8x256xi1>, vector<8x256xi32>
    %cst_12 = arith.constant dense<2147483647> : vector<8xi32>
    %23 = vector.multi_reduction <minsi>, %22, %cst_12 [1] : vector<8x256xi32> to vector<8xi32>
    %24 = vector.shape_cast %23 : vector<8xi32> to vector<8x1xi32>
    %25 = vector.broadcast %24 : vector<8x1xi32> to vector<8x256xi32>
    %26 = arith.cmpi eq, %4, %25 : vector<8x256xi32>
    %27 = arith.extui %26 : vector<8x256xi1> to vector<8x256xi32>
    %28 = arith.sitofp %27 : vector<8x256xi32> to vector<8x256xf32>
    %29 = arith.truncf %28 : vector<8x256xf32> to vector<8x256xbf16>
    %cst_13 = arith.constant dense<0.000000e+00> : vector<8x128xf32>
    %30 = tpu.matmul %29, %2, %cst_13 {dimension_numbers = #tpu.dot_dimension_numbers<[1], [0], [0], [1], [0, 0, 1, 1], [], []>} : vector<8x256xbf16>, vector<256x128xbf16>, vector<8x128xf32> -> vector<8x128xf32>
    %31 = arith.subf %0, %30 : vector<8x128xf32>
    %32 = arith.mulf %31, %31 : vector<8x128xf32>
    %cst_14 = arith.constant dense<0.000000e+00> : vector<8xf32>
    %33 = vector.multi_reduction <add>, %32, %cst_14 [1] : vector<8x128xf32> to vector<8xf32>
    %34 = vector.shape_cast %33 : vector<8xf32> to vector<8x1xf32>
    %35 = arith.truncf %31 : vector<8x128xf32> to vector<8x128xbf16>
    %cst_15 = arith.constant dense<0.000000e+00> : vector<8x256xf32>
    %36 = tpu.matmul %35, %1, %cst_15 {dimension_numbers = #tpu.dot_dimension_numbers<[1], [0], [0], [1], [0, 0, 1, 1], [], []>} : vector<8x128xbf16>, vector<128x256xbf16>, vector<8x256xf32> -> vector<8x256xf32>
    %37 = vector.broadcast %34 : vector<8x1xf32> to vector<8x256xf32>
    %38 = vector.broadcast %3 : vector<1x256xf32> to vector<8x256xf32>
    %39 = arith.addf %37, %38 : vector<8x256xf32>
    %40 = arith.addf %39, %36 : vector<8x256xf32>
    %c1 = arith.constant 1 : index
    %c0_16 = arith.constant 0 : index
    %c0_17 = arith.constant 0 : index
    %41 = vector.load %arg6[%c1, %c0_16, %c0_17] : memref<3x8x256xf32, #tpu.memory_space<vmem>>, vector<1x8x256xf32>
    %42 = vector.shape_cast %41 : vector<1x8x256xf32> to vector<8x256xf32>
    %43 = vector.shape_cast %40 : vector<8x256xf32> to vector<1x8x256xf32>
    tpu.vector_store %arg6[%c1, %c0_16, %c0_17], %43 {strides = array<i32>} : memref<3x8x256xf32, #tpu.memory_space<vmem>>, vector<1x8x256xf32>,
    %cst_18 = arith.constant dense<0x7F800000> : vector<8xf32>
    %44 = vector.multi_reduction <minimumf>, %40, %cst_18 [1] : vector<8x256xf32> to vector<8xf32>
    %45 = vector.shape_cast %44 : vector<8xf32> to vector<8x1xf32>
    %46 = vector.broadcast %45 : vector<8x1xf32> to vector<8x256xf32>
    %47 = arith.cmpf oeq, %40, %46 : vector<8x256xf32>
    %c256_i32_19 = arith.constant 256 : i32
    %48 = vector.broadcast %c256_i32_19 : i32 to vector<8x256xi32>
    %49 = arith.select %47, %4, %48 : vector<8x256xi1>, vector<8x256xi32>
    %cst_20 = arith.constant dense<2147483647> : vector<8xi32>
    %50 = vector.multi_reduction <minsi>, %49, %cst_20 [1] : vector<8x256xi32> to vector<8xi32>
    %51 = vector.shape_cast %50 : vector<8xi32> to vector<8x1xi32>
    %52 = vector.broadcast %51 : vector<8x1xi32> to vector<8x256xi32>
    %53 = arith.cmpi eq, %4, %52 : vector<8x256xi32>
    %54 = arith.extui %53 : vector<8x256xi1> to vector<8x256xi32>
    %55 = arith.sitofp %54 : vector<8x256xi32> to vector<8x256xf32>
    %56 = arith.truncf %55 : vector<8x256xf32> to vector<8x256xbf16>
    %cst_21 = arith.constant dense<0.000000e+00> : vector<8x128xf32>
    %57 = tpu.matmul %56, %2, %cst_21 {dimension_numbers = #tpu.dot_dimension_numbers<[1], [0], [0], [1], [0, 0, 1, 1], [], []>} : vector<8x256xbf16>, vector<256x128xbf16>, vector<8x128xf32> -> vector<8x128xf32>
    %58 = arith.subf %31, %57 : vector<8x128xf32>
    %59 = arith.mulf %58, %58 : vector<8x128xf32>
    %cst_22 = arith.constant dense<0.000000e+00> : vector<8xf32>
    %60 = vector.multi_reduction <add>, %59, %cst_22 [1] : vector<8x128xf32> to vector<8xf32>
    %61 = vector.shape_cast %60 : vector<8xf32> to vector<8x1xf32>
    %62 = arith.truncf %58 : vector<8x128xf32> to vector<8x128xbf16>
    %cst_23 = arith.constant dense<0.000000e+00> : vector<8x256xf32>
    %63 = tpu.matmul %62, %1, %cst_23 {dimension_numbers = #tpu.dot_dimension_numbers<[1], [0], [0], [1], [0, 0, 1, 1], [], []>} : vector<8x128xbf16>, vector<128x256xbf16>, vector<8x256xf32> -> vector<8x256xf32>
    %64 = vector.broadcast %61 : vector<8x1xf32> to vector<8x256xf32>
    %65 = vector.broadcast %3 : vector<1x256xf32> to vector<8x256xf32>
    %66 = arith.addf %64, %65 : vector<8x256xf32>
    %67 = arith.addf %66, %63 : vector<8x256xf32>
    %c2 = arith.constant 2 : index
    %c0_24 = arith.constant 0 : index
    %c0_25 = arith.constant 0 : index
    %68 = vector.load %arg6[%c2, %c0_24, %c0_25] : memref<3x8x256xf32, #tpu.memory_space<vmem>>, vector<1x8x256xf32>
    %69 = vector.shape_cast %68 : vector<1x8x256xf32> to vector<8x256xf32>
    %70 = vector.shape_cast %67 : vector<8x256xf32> to vector<1x8x256xf32>
    tpu.vector_store %arg6[%c2, %c0_24, %c0_25], %70 {strides = array<i32>} : memref<3x8x256xf32, #tpu.memory_space<vmem>>, vector<1x8x256xf32>,
    %cst_26 = arith.constant dense<0x7F800000> : vector<8xf32>
    %71 = vector.multi_reduction <minimumf>, %67, %cst_26 [1] : vector<8x256xf32> to vector<8xf32>
    %72 = vector.shape_cast %71 : vector<8xf32> to vector<8x1xf32>
    %73 = vector.broadcast %72 : vector<8x1xf32> to vector<8x256xf32>
    %74 = arith.cmpf oeq, %67, %73 : vector<8x256xf32>
    %c256_i32_27 = arith.constant 256 : i32
    %75 = vector.broadcast %c256_i32_27 : i32 to vector<8x256xi32>
    %76 = arith.select %74, %4, %75 : vector<8x256xi1>, vector<8x256xi32>
    %cst_28 = arith.constant dense<2147483647> : vector<8xi32>
    %77 = vector.multi_reduction <minsi>, %76, %cst_28 [1] : vector<8x256xi32> to vector<8xi32>
    %78 = vector.shape_cast %77 : vector<8xi32> to vector<8x1xi32>
    %79 = vector.broadcast %78 : vector<8x1xi32> to vector<8x256xi32>
    %80 = arith.cmpi eq, %4, %79 : vector<8x256xi32>
    %81 = arith.extui %80 : vector<8x256xi1> to vector<8x256xi32>
    %82 = arith.sitofp %81 : vector<8x256xi32> to vector<8x256xf32>
    %83 = arith.truncf %82 : vector<8x256xf32> to vector<8x256xbf16>
    %cst_29 = arith.constant dense<0.000000e+00> : vector<8x128xf32>
    %84 = tpu.matmul %83, %2, %cst_29 {dimension_numbers = #tpu.dot_dimension_numbers<[1], [0], [0], [1], [0, 0, 1, 1], [], []>} : vector<8x256xbf16>, vector<256x128xbf16>, vector<8x128xf32> -> vector<8x128xf32>
    %85 = arith.subf %58, %84 : vector<8x128xf32>
    %86 = arith.subf %0, %85 : vector<8x128xf32>
    %c0_30 = arith.constant 0 : index
    %c0_31 = arith.constant 0 : index
    %87 = vector.load %arg5[%c0_30, %c0_31] : memref<8x128xf32, #tpu.memory_space<vmem>>, vector<8x128xf32>
    tpu.vector_store %arg5[%c0_30, %c0_31], %86 {strides = array<i32>} : memref<8x128xf32, #tpu.memory_space<vmem>>, vector<8x128xf32>,
    return
  }
  func.func @transform_0(%arg0: i32) -> (i32, i32) {
    %c0_i32 = arith.constant 0 : i32
    %c0_i32_0 = arith.constant 0 : i32
    return %arg0, %c0_i32 : i32, i32
  }
  func.func @transform_1(%arg0: i32) -> (i32, i32) {
    %c0_i32 = arith.constant 0 : i32
    %c0_i32_0 = arith.constant 0 : i32
    %c0_i32_1 = arith.constant 0 : i32
    return %c0_i32, %c0_i32_0 : i32, i32
  }
  func.func @transform_2(%arg0: i32) -> (i32, i32) {
    %c0_i32 = arith.constant 0 : i32
    %c0_i32_0 = arith.constant 0 : i32
    %c0_i32_1 = arith.constant 0 : i32
    return %c0_i32, %c0_i32_0 : i32, i32
  }
  func.func @transform_3(%arg0: i32) -> (i32, i32) {
    %c0_i32 = arith.constant 0 : i32
    %c0_i32_0 = arith.constant 0 : i32
    %c0_i32_1 = arith.constant 0 : i32
    return %c0_i32, %c0_i32_0 : i32, i32
  }
  func.func @transform_4(%arg0: i32) -> (i32, i32) {
    %c0_i32 = arith.constant 0 : i32
    %c0_i32_0 = arith.constant 0 : i32
    return %arg0, %c0_i32 : i32, i32
  }
  func.func @transform_5(%arg0: i32) -> (i32, i32, i32) {
    %c0_i32 = arith.constant 0 : i32
    %c0_i32_0 = arith.constant 0 : i32
    %c0_i32_1 = arith.constant 0 : i32
    return %c0_i32, %arg0, %c0_i32_0 : i32, i32, i32
  }
}

</mosaic_0001>

<llo_original>
// kernel: tpu_custom_call.1
$region0: #{tpu_custom_call.1}
  #allocation0 [shape = 'u32[]', space=smem, size = 0x4, offset = 0x4, fixed_abs, tag = 'smem constant byte address 0x4 - core index']
  #allocation1 [shape = 'u32[144,128]{1,0:T(1,128)}', space=vmem, size = 0x12000, scoped, tag = 'internal scratch']
  %s0 = inlined_call_operand.hbm [shape: f32[8,128], index: 0, kind: input, shape index: {}]
  %s1 = inlined_call_operand.hbm [shape: bf16[128,256], index: 1, kind: input, shape index: {}]
  %s2 = inlined_call_operand.hbm [shape: bf16[256,128], index: 2, kind: input, shape index: {}]
  %s3 = inlined_call_operand.vmem [shape: f32[1,256], index: 3, kind: input, shape index: {}]
  %s4 = inlined_call_operand.hbm [shape: f32[8,128], index: 4, kind: output, shape index: {0}]
  %s5 = inlined_call_operand.hbm [shape: f32[3,8,256], index: 5, kind: output, shape index: {1}]
  %6 = xla_tuple %s4, %s5
  %s7 = sld [smem:[#allocation0]]
  $region46: #{tpu_custom_call.1} parent=0
    _
  %s9 = ssub.s32 1, %s7
  %s10 = scalar_select 0, %s9, %s7
  $region1: #{tpu_custom_call.1} parent=0
    #allocation2 [shape = 'u8[4096]{0}', space=vmem, size = 0x1000, scoped, tag = 'input window, operand 0, single buffered']
    #allocation3 [shape = 's32[1]{0}', space=sflag, size = 0x4, scoped, tag = 'scoped memory for tpu_custom_call.1']
    #allocation4 [shape = 's32[1]{0}', space=sflag, size = 0x4, scoped, tag = 'scoped memory for tpu_custom_call.1']
    #allocation5 [shape = 'u8[65536]{0}', space=vmem, size = 0x10000, scoped, tag = 'input window, operand 1, single buffered']
    #allocation6 [shape = 's32[1]{0}', space=sflag, size = 0x4, scoped, tag = 'scoped memory for tpu_custom_call.1']
    #allocation7 [shape = 'u8[65536]{0}', space=vmem, size = 0x10000, scoped, tag = 'input window, operand 2, single buffered']
    #allocation8 [shape = 'u8[4096]{0}', space=vmem, size = 0x1000, scoped, tag = 'output window, operand 0, single buffered']
    #allocation9 [shape = 'u8[24576]{0}', space=vmem, size = 0x6000, scoped, tag = 'output window, operand 1, single buffered']
    #allocation10 [shape = 's32[1]{0}', space=sflag, size = 0x4, scoped, tag = 'scoped memory for tpu_custom_call.1']
    %11 = vsyncpa [#allocation3], 0
    %12 = vsyncpa [#allocation6], 0
    %13 = vsyncpa [#allocation4], 0
    %14 = vsyncpa [#allocation10], 0
    // Predicated region
    $region2: #{tpu_custom_call.1} parent=1 // pred_check
      _
    $region3: #{tpu_custom_call.1} parent=1 // pred_check_branch
      %16 = sbr.rel (0) target = $region5
    $region4: #{tpu_custom_call.1} parent=1 // pred_region
      %s18 = ssub.s32 128, 128
      %19 = vsyncadd [#allocation3], %s18
      %s21 = sshll.u32 [#allocation2], 4
      %s22 = int_to_ptr.vmem [resolvable:$true] %s21
      %24 = dma.hbm_to_vmem [thread:$0]  %s0, 128, %s22, [#allocation3]
    $region5: #{tpu_custom_call.1} parent=1 // pred_fallthru
      _
    // Predicated region
    $region6: #{tpu_custom_call.1} parent=1 // pred_check
      _
    $region7: #{tpu_custom_call.1} parent=1 // pred_check_branch
      %26 = sbr.rel (0) target = $region9
    $region8: #{tpu_custom_call.1} parent=1 // pred_region
      %s28 = ssub.s32 2048, 2048
      %29 = vsyncadd [#allocation6], %s28
      %s30 = sshll.u32 [#allocation5], 4
      %s31 = int_to_ptr.vmem [resolvable:$true] %s30
      %36 = dma.hbm_to_vmem [thread:$0]  %s1, 2048, %s31, [#allocation6], 128, 128, 8
    $region9: #{tpu_custom_call.1} parent=1 // pred_fallthru
      _
    // Predicated region
    $region10: #{tpu_custom_call.1} parent=1 // pred_check
      _
    $region11: #{tpu_custom_call.1} parent=1 // pred_check_branch
      %38 = sbr.rel (0) target = $region13
    $region12: #{tpu_custom_call.1} parent=1 // pred_region
      %s40 = ssub.s32 2048, 2048
      %41 = vsyncadd [#allocation6], %s40
      %s42 = sshll.u32 [#allocation7], 4
      %s43 = int_to_ptr.vmem [resolvable:$true] %s42
      %48 = dma.hbm_to_vmem [thread:$0]  %s2, 2048, %s43, [#allocation6], 64, 64, 4
    $region13: #{tpu_custom_call.1} parent=1 // pred_fallthru
      _
    // Predicated region
    $region14: #{tpu_custom_call.1} parent=1 // pred_check
      _
    $region15: #{tpu_custom_call.1} parent=1 // pred_check_branch
      %50 = sbr.rel (0) target = $region17
    $region16: #{tpu_custom_call.1} parent=1 // pred_region
      _
    $region17: #{tpu_custom_call.1} parent=1 // pred_fallthru
      _
    // Predicated region
    $region18: #{tpu_custom_call.1} parent=1 // pred_check
      _
    $region19: #{tpu_custom_call.1} parent=1 // pred_check_branch
      %52 = sbr.rel (0) target = $region21
    $region20: #{tpu_custom_call.1} parent=1 // pred_region
      %53 = dma.done [#allocation3], 128
    $region21: #{tpu_custom_call.1} parent=1 // pred_fallthru
      _
    // Predicated region
    $region22: #{tpu_custom_call.1} parent=1 // pred_check
      _
    $region23: #{tpu_custom_call.1} parent=1 // pred_check_branch
      %55 = sbr.rel (0) target = $region25
    $region24: #{tpu_custom_call.1} parent=1 // pred_region
      %56 = dma.done [#allocation6], 2048
    $region25: #{tpu_custom_call.1} parent=1 // pred_fallthru
      _
    // Predicated region
    $region26: #{tpu_custom_call.1} parent=1 // pred_check
      _
    $region27: #{tpu_custom_call.1} parent=1 // pred_check_branch
      %58 = sbr.rel (0) target = $region29
    $region28: #{tpu_custom_call.1} parent=1 // pred_region
      %59 = dma.done [#allocation6], 2048
    $region29: #{tpu_custom_call.1} parent=1 // pred_fallthru
      _
    %v61 = vld [vmem:[#allocation2] sm:$0xff]
    %v62 = vld [vmem:[#allocation5] sm:$0xff]
    %v63 = vld [vmem:[#allocation5 + $0x8] sm:$0xff]
    %v64 = vld [vmem:[#allocation5 + $0x10] sm:$0xff]
    %v65 = vld [vmem:[#allocation5 + $0x18] sm:$0xff]
    %v66 = vld [vmem:[#allocation5 + $0x20] sm:$0xff]
    %v67 = vld [vmem:[#allocation5 + $0x28] sm:$0xff]
    %v68 = vld [vmem:[#allocation5 + $0x30] sm:$0xff]
    %v69 = vld [vmem:[#allocation5 + $0x38] sm:$0xff]
    %v70 = vld [vmem:[#allocation5 + $0x40] sm:$0xff]
    %v71 = vld [vmem:[#allocation5 + $0x48] sm:$0xff]
    %v72 = vld [vmem:[#allocation5 + $0x50] sm:$0xff]
    %v73 = vld [vmem:[#allocation5 + $0x58] sm:$0xff]
    %v74 = vld [vmem:[#allocation5 + $0x60] sm:$0xff]
    %v75 = vld [vmem:[#allocation5 + $0x68] sm:$0xff]
    %v76 = vld [vmem:[#allocation5 + $0x70] sm:$0xff]
    %v77 = vld [vmem:[#allocation5 + $0x78] sm:$0xff]
    %v78 = vld [vmem:[#allocation7] sm:$0xf]
    %v79 = vld [vmem:[#allocation7 + $0x4] sm:$0xf]
    %v80 = vld [vmem:[#allocation7 + $0x8] sm:$0xf]
    %v81 = vld [vmem:[#allocation7 + $0xc] sm:$0xf]
    %v82 = vld [vmem:[#allocation7 + $0x10] sm:$0xf]
    %v83 = vld [vmem:[#allocation7 + $0x14] sm:$0xf]
    %v84 = vld [vmem:[#allocation7 + $0x18] sm:$0xf]
    %v85 = vld [vmem:[#allocation7 + $0x1c] sm:$0xf]
    %v86 = vld [vmem:[#allocation7 + $0x20] sm:$0xf]
    %v87 = vld [vmem:[#allocation7 + $0x24] sm:$0xf]
    %v88 = vld [vmem:[#allocation7 + $0x28] sm:$0xf]
    %v89 = vld [vmem:[#allocation7 + $0x2c] sm:$0xf]
    %v90 = vld [vmem:[#allocation7 + $0x30] sm:$0xf]
    %v91 = vld [vmem:[#allocation7 + $0x34] sm:$0xf]
    %v92 = vld [vmem:[#allocation7 + $0x38] sm:$0xf]
    %v93 = vld [vmem:[#allocation7 + $0x3c] sm:$0xf]
    %v94 = vld [vmem:[#allocation7 + $0x40] sm:$0xf]
    %v95 = vld [vmem:[#allocation7 + $0x44] sm:$0xf]
    %v96 = vld [vmem:[#allocation7 + $0x48] sm:$0xf]
    %v97 = vld [vmem:[#allocation7 + $0x4c] sm:$0xf]
    %v98 = vld [vmem:[#allocation7 + $0x50] sm:$0xf]
    %v99 = vld [vmem:[#allocation7 + $0x54] sm:$0xf]
    %v100 = vld [vmem:[#allocation7 + $0x58] sm:$0xf]
    %v101 = vld [vmem:[#allocation7 + $0x5c] sm:$0xf]
    %v102 = vld [vmem:[#allocation7 + $0x60] sm:$0xf]
    %v103 = vld [vmem:[#allocation7 + $0x64] sm:$0xf]
    %v104 = vld [vmem:[#allocation7 + $0x68] sm:$0xf]
    %v105 = vld [vmem:[#allocation7 + $0x6c] sm:$0xf]
    %v106 = vld [vmem:[#allocation7 + $0x70] sm:$0xf]
    %v107 = vld [vmem:[#allocation7 + $0x74] sm:$0xf]
    %v108 = vld [vmem:[#allocation7 + $0x78] sm:$0xf]
    %v109 = vld [vmem:[#allocation7 + $0x7c] sm:$0xf]
    %v110 = vld [vmem:[%s3] sm:$0x3]
    %v111 = vlaneseq
    %v112 = vand.u32 %v111, 127
    %v113 = vadd.s32 %v112, 128
    %v114 = vmul.f32 %v61, %v61
    %115 = vadd.xlane.f32.xlu0 %v114
    %v116 = vpop.xlane.xlu0 %115
    %v117 = vpack.c.bf16 %v61, %v61
    %v134 = vunpack.c.l.b16 %v62
    %v135 = vunpack.c.h.b16 %v62
    %v136 = vunpack.c.l.b16 %v63
    %v137 = vunpack.c.h.b16 %v63
    %v138 = vunpack.c.l.b16 %v64
    %v139 = vunpack.c.h.b16 %v64
    %v140 = vunpack.c.l.b16 %v65
    %v141 = vunpack.c.h.b16 %v65
    %v142 = vunpack.c.l.b16 %v66
    %v143 = vunpack.c.h.b16 %v66
    %v144 = vunpack.c.l.b16 %v67
    %v145 = vunpack.c.h.b16 %v67
    %v146 = vunpack.c.l.b16 %v68
    %v147 = vunpack.c.h.b16 %v68
    %v148 = vunpack.c.l.b16 %v69
    %v149 = vunpack.c.h.b16 %v69
    %v150 = vunpack.c.l.b16 %v70
    %v151 = vunpack.c.h.b16 %v70
    %v152 = vunpack.c.l.b16 %v71
    %v153 = vunpack.c.h.b16 %v71
    %v154 = vunpack.c.l.b16 %v72
    %v155 = vunpack.c.h.b16 %v72
    %v156 = vunpack.c.l.b16 %v73
    %v157 = vunpack.c.h.b16 %v73
    %v158 = vunpack.c.l.b16 %v74
    %v159 = vunpack.c.h.b16 %v74
    %v160 = vunpack.c.l.b16 %v75
    %v161 = vunpack.c.h.b16 %v75
    %v162 = vunpack.c.l.b16 %v76
    %v163 = vunpack.c.h.b16 %v76
    %v164 = vunpack.c.l.b16 %v77
    %v165 = vunpack.c.h.b16 %v77
    %v166 = vpack.c.b16 %v136, %v134
    %v167 = vpack.c.b16 %v137, %v135
    %v168 = vpack.c.b16 %v140, %v138
    %v169 = vpack.c.b16 %v141, %v139
    %v170 = vpack.c.b16 %v144, %v142
    %v171 = vpack.c.b16 %v145, %v143
    %v172 = vpack.c.b16 %v148, %v146
    %v173 = vpack.c.b16 %v149, %v147
    %v174 = vpack.c.b16 %v152, %v150
    %v175 = vpack.c.b16 %v153, %v151
    %v176 = vpack.c.b16 %v156, %v154
    %v177 = vpack.c.b16 %v157, %v155
    %v178 = vpack.c.b16 %v160, %v158
    %v179 = vpack.c.b16 %v161, %v159
    %v180 = vpack.c.b16 %v164, %v162
    %v181 = vpack.c.b16 %v165, %v163
    %198 = vmatprep.subr.bf16.mxu0 %v181
    %199 = vmatpush1.bf16.msra.mxu0 %v180
    %200 = vmatprep.subr.bf16.mxu0 %v179
    %201 = vmatpush1.bf16.msra.mxu0 %v178
    %202 = vmatprep.subr.bf16.mxu0 %v177
    %203 = vmatpush1.bf16.msra.mxu0 %v176
    %204 = vmatprep.subr.bf16.mxu0 %v175
    %205 = vmatpush1.bf16.msra.mxu0 %v174
    %206 = vmatprep.subr.bf16.mxu0 %v173
    %207 = vmatpush1.bf16.msra.mxu0 %v172
    %208 = vmatprep.subr.bf16.mxu0 %v171
    %209 = vmatpush1.bf16.msra.mxu0 %v170
    %210 = vmatprep.subr.bf16.mxu0 %v169
    %211 = vmatpush1.bf16.msra.mxu0 %v168
    %212 = vmatprep.subr.bf16.mxu0 %v167
    %213 = vmatpush1.bf16.msra.mxu0 %v166
    %214 = vmatprep.subr.bf16.mxu0 0
    %215 = vmatpush2.bf16.msra.mxu0 0
    %216 = vmatprep.subr.bf16.mxu0 0
    %217 = vmatpush2.bf16.msra.mxu0 0
    %218 = vmatprep.subr.bf16.mxu0 0
    %219 = vmatpush2.bf16.msra.mxu0 0
    %220 = vmatprep.subr.bf16.mxu0 0
    %221 = vmatpush2.bf16.msra.mxu0 0
    %222 = vmatprep.subr.bf16.mxu0 0
    %223 = vmatpush2.bf16.msra.mxu0 0
    %224 = vmatprep.subr.bf16.mxu0 0
    %225 = vmatpush2.bf16.msra.mxu0 0
    %226 = vmatprep.subr.bf16.mxu0 0
    %227 = vmatpush2.bf16.msra.mxu0 0
    %228 = vmatprep.subr.bf16.mxu0 0
    %229 = vmatpush2.bf16.msra.mxu0 0
    %230 = vmatprep.mubr.bf16.mxu0 0
    %231 = vmatmul.mubr.bf16.gmra.mxu0 %v117
    %v232 = vpop.f32.mrf.mxu0
    %v233 = vadd.f32 0.0, %v232
    %v234 = vpop.f32.mrf.mxu0
    %v235 = vadd.f32 0.0, %v234
    %v236 = vpop.f32.mrf.mxu0
    %v237 = vpop.f32.mrf.mxu0
    %238 = vdwg.mxu0
    %v240 = vlaneseq
    %v241 = vshrl.u32 %v240, 7
    %v242 = vsub.s32 0, %v241
    %v243 = vrot.slane %v110, %v242
    %v244 = vlaneseq
    %v245 = vshrl.u32 %v244, 7
    %v246 = vsub.s32 1, %v245
    %v247 = vrot.slane %v110, %v246
    %v250 = vadd.f32 %v116, %v243
    %v251 = vadd.f32 %v116, %v247
    %v252 = vadd.f32 %v250, %v233
    %v253 = vadd.f32 %v251, %v235
    %254 = vst [vmem:[#allocation9] sm:$0xff] %v252
    %255 = vst [vmem:[#allocation9 + $0x8] sm:$0xff] %v253
    %v256 = vmin.f32 %v252, %v253
    %257 = vmin.xlane.f32.xlu0 %v256
    %v258 = vpop.xlane.xlu0 %257
    %vm259 = vcmp.eq.f32.partialorder %v252, %v258
    %vm260 = vcmp.eq.f32.partialorder %v253, %v258
    %v261 = vsel %vm259, %v112, 256
    %v262 = vsel %vm260, %v113, 256
    %vm263 = vcmp.lt.s32.totalorder %v261, %v262
    %v264 = vsel %vm263, %v261, %v262
    %v265 = vand.u32 %v264, 65535
    %v266 = vshra.s32 %v264, 16
    %v267 = vcvt.s32.f32 %v265
    %v268 = vcvt.s32.f32 %v266
    %269 = vmin.xlane.f32.xlu0 %v268
    %v270 = vpop.xlane.xlu0 %269
    %vm271 = vcmp.eq.f32.partialorder %v268, %v270
    %v272 = vsel %vm271, %v267, inf
    %273 = vmin.xlane.f32.xlu0 %v272
    %v274 = vpop.xlane.xlu0 %273
    %v275 = vcvt.f32.s32 %v274
    %v276 = vcvt.f32.s32 %v270
    %v277 = vshll.u32 %v276, 16
    %v278 = vadd.s32 %v277, %v275
    %vm279 = vcmp.eq.s32.totalorder %v112, %v278
    %vm280 = vcmp.eq.s32.totalorder %v113, %v278
    %v281 = vsel %vm279, 1, 0
    %v282 = vsel %vm280, 1, 0
    %v283 = vcvt.s32.f32 %v281
    %v284 = vcvt.s32.f32 %v282
    %v285 = vpack.c.bf16 %v283, %v283
    %v286 = vpack.c.bf16 %v284, %v284
    %v319 = vunpack.c.l.b16 %v78
    %v320 = vunpack.c.l.b16 %v79
    %v321 = vunpack.c.l.b16 %v80
    %v322 = vunpack.c.l.b16 %v81
    %v323 = vunpack.c.l.b16 %v82
    %v324 = vunpack.c.l.b16 %v83
    %v325 = vunpack.c.l.b16 %v84
    %v326 = vunpack.c.l.b16 %v85
    %v327 = vunpack.c.l.b16 %v86
    %v328 = vunpack.c.l.b16 %v87
    %v329 = vunpack.c.l.b16 %v88
    %v330 = vunpack.c.l.b16 %v89
    %v331 = vunpack.c.l.b16 %v90
    %v332 = vunpack.c.l.b16 %v91
    %v333 = vunpack.c.l.b16 %v92
    %v334 = vunpack.c.l.b16 %v93
    %v335 = vunpack.c.l.b16 %v94
    %v336 = vunpack.c.l.b16 %v95
    %v337 = vunpack.c.l.b16 %v96
    %v338 = vunpack.c.l.b16 %v97
    %v339 = vunpack.c.l.b16 %v98
    %v340 = vunpack.c.l.b16 %v99
    %v341 = vunpack.c.l.b16 %v100
    %v342 = vunpack.c.l.b16 %v101
    %v343 = vunpack.c.l.b16 %v102
    %v344 = vunpack.c.l.b16 %v103
    %v345 = vunpack.c.l.b16 %v104
    %v346 = vunpack.c.l.b16 %v105
    %v347 = vunpack.c.l.b16 %v106
    %v348 = vunpack.c.l.b16 %v107
    %v349 = vunpack.c.l.b16 %v108
    %v350 = vunpack.c.l.b16 %v109
    %v351 = vpack.c.b16 %v320, %v319
    %v352 = vpack.c.b16 %v322, %v321
    %v353 = vpack.c.b16 %v324, %v323
    %v354 = vpack.c.b16 %v326, %v325
    %v355 = vpack.c.b16 %v328, %v327
    %v356 = vpack.c.b16 %v330, %v329
    %v357 = vpack.c.b16 %v332, %v331
    %v358 = vpack.c.b16 %v334, %v333
    %v359 = vpack.c.b16 %v336, %v335
    %v360 = vpack.c.b16 %v338, %v337
    %v361 = vpack.c.b16 %v340, %v339
    %v362 = vpack.c.b16 %v342, %v341
    %v363 = vpack.c.b16 %v344, %v343
    %v364 = vpack.c.b16 %v346, %v345
    %v365 = vpack.c.b16 %v348, %v347
    %v366 = vpack.c.b16 %v350, %v349
    %383 = vmatprep.subr.bf16.mxu0 0
    %384 = vmatpush1.bf16.msra.mxu0 %v358
    %385 = vmatprep.subr.bf16.mxu0 0
    %386 = vmatpush1.bf16.msra.mxu0 %v357
    %387 = vmatprep.subr.bf16.mxu0 0
    %388 = vmatpush1.bf16.msra.mxu0 %v356
    %389 = vmatprep.subr.bf16.mxu0 0
    %390 = vmatpush1.bf16.msra.mxu0 %v355
    %391 = vmatprep.subr.bf16.mxu0 0
    %392 = vmatpush1.bf16.msra.mxu0 %v354
    %393 = vmatprep.subr.bf16.mxu0 0
    %394 = vmatpush1.bf16.msra.mxu0 %v353
    %395 = vmatprep.subr.bf16.mxu0 0
    %396 = vmatpush1.bf16.msra.mxu0 %v352
    %397 = vmatprep.subr.bf16.mxu0 0
    %398 = vmatpush1.bf16.msra.mxu0 %v351
    %399 = vmatprep.subr.bf16.mxu0 0
    %400 = vmatpush2.bf16.msra.mxu0 %v366
    %401 = vmatprep.subr.bf16.mxu0 0
    %402 = vmatpush2.bf16.msra.mxu0 %v365
    %403 = vmatprep.subr.bf16.mxu0 0
    %404 = vmatpush2.bf16.msra.mxu0 %v364
    %405 = vmatprep.subr.bf16.mxu0 0
    %406 = vmatpush2.bf16.msra.mxu0 %v363
    %407 = vmatprep.subr.bf16.mxu0 0
    %408 = vmatpush2.bf16.msra.mxu0 %v362
    %409 = vmatprep.subr.bf16.mxu0 0
    %410 = vmatpush2.bf16.msra.mxu0 %v361
    %411 = vmatprep.subr.bf16.mxu0 0
    %412 = vmatpush2.bf16.msra.mxu0 %v360
    %413 = vmatprep.subr.bf16.mxu0 0
    %414 = vmatpush2.bf16.msra.mxu0 %v359
    %415 = vmatprep.mubr.bf16.mxu0 %v286
    %416 = vmatmul.mubr.bf16.gmra.mxu0 %v285
    %v417 = vpop.f32.mrf.mxu0
    %v418 = vadd.f32 0.0, %v417
    %v419 = vpop.f32.mrf.mxu0
    %v420 = vpop.f32.mrf.mxu0
    %v421 = vpop.f32.mrf.mxu0
    %422 = vdwg.mxu0
    %v423 = vsub.f32 %v61, %v418
    %v424 = vmul.f32 %v423, %v423
    %425 = vadd.xlane.f32.xlu0 %v424
    %v426 = vpop.xlane.xlu0 %425
    %v427 = vpack.c.bf16 %v423, %v423
    %428 = vmatprep.subr.bf16.mxu0 %v181
    %429 = vmatpush1.bf16.msra.mxu0 %v180
    %430 = vmatprep.subr.bf16.mxu0 %v179
    %431 = vmatpush1.bf16.msra.mxu0 %v178
    %432 = vmatprep.subr.bf16.mxu0 %v177
    %433 = vmatpush1.bf16.msra.mxu0 %v176
    %434 = vmatprep.subr.bf16.mxu0 %v175
    %435 = vmatpush1.bf16.msra.mxu0 %v174
    %436 = vmatprep.subr.bf16.mxu0 %v173
    %437 = vmatpush1.bf16.msra.mxu0 %v172
    %438 = vmatprep.subr.bf16.mxu0 %v171
    %439 = vmatpush1.bf16.msra.mxu0 %v170
    %440 = vmatprep.subr.bf16.mxu0 %v169
    %441 = vmatpush1.bf16.msra.mxu0 %v168
    %442 = vmatprep.subr.bf16.mxu0 %v167
    %443 = vmatpush1.bf16.msra.mxu0 %v166
    %444 = vmatprep.subr.bf16.mxu0 0
    %445 = vmatpush2.bf16.msra.mxu0 0
    %446 = vmatprep.subr.bf16.mxu0 0
    %447 = vmatpush2.bf16.msra.mxu0 0
    %448 = vmatprep.subr.bf16.mxu0 0
    %449 = vmatpush2.bf16.msra.mxu0 0
    %450 = vmatprep.subr.bf16.mxu0 0
    %451 = vmatpush2.bf16.msra.mxu0 0
    %452 = vmatprep.subr.bf16.mxu0 0
    %453 = vmatpush2.bf16.msra.mxu0 0
    %454 = vmatprep.subr.bf16.mxu0 0
    %455 = vmatpush2.bf16.msra.mxu0 0
    %456 = vmatprep.subr.bf16.mxu0 0
    %457 = vmatpush2.bf16.msra.mxu0 0
    %458 = vmatprep.subr.bf16.mxu0 0
    %459 = vmatpush2.bf16.msra.mxu0 0
    %460 = vmatprep.mubr.bf16.mxu0 0
    %461 = vmatmul.mubr.bf16.gmra.mxu0 %v427
    %v462 = vpop.f32.mrf.mxu0
    %v463 = vadd.f32 0.0, %v462
    %v464 = vpop.f32.mrf.mxu0
    %v465 = vadd.f32 0.0, %v464
    %v466 = vpop.f32.mrf.mxu0
    %v467 = vpop.f32.mrf.mxu0
    %468 = vdwg.mxu0
    %v469 = vadd.f32 %v426, %v243
    %v470 = vadd.f32 %v426, %v247
    %v471 = vadd.f32 %v469, %v463
    %v472 = vadd.f32 %v470, %v465
    %s473 = scalar_lea.vmem [#allocation9], 16
    %474 = vst [vmem:[%s473] sm:$0xff] %v471
    %475 = vst [vmem:[%s473 + $0x8] sm:$0xff] %v472
    %v476 = vmin.f32 %v471, %v472
    %477 = vmin.xlane.f32.xlu0 %v476
    %v478 = vpop.xlane.xlu0 %477
    %vm479 = vcmp.eq.f32.partialorder %v471, %v478
    %vm480 = vcmp.eq.f32.partialorder %v472, %v478
    %v481 = vsel %vm479, %v112, 256
    %v482 = vsel %vm480, %v113, 256
    %vm483 = vcmp.lt.s32.totalorder %v481, %v482
    %v484 = vsel %vm483, %v481, %v482
    %v485 = vand.u32 %v484, 65535
    %v486 = vshra.s32 %v484, 16
    %v487 = vcvt.s32.f32 %v485
    %v488 = vcvt.s32.f32 %v486
    %489 = vmin.xlane.f32.xlu0 %v488
    %v490 = vpop.xlane.xlu0 %489
    %vm491 = vcmp.eq.f32.partialorder %v488, %v490
    %v492 = vsel %vm491, %v487, inf
    %493 = vmin.xlane.f32.xlu0 %v492
    %v494 = vpop.xlane.xlu0 %493
    %v495 = vcvt.f32.s32 %v494
    %v496 = vcvt.f32.s32 %v490
    %v497 = vshll.u32 %v496, 16
    %v498 = vadd.s32 %v497, %v495
    %vm499 = vcmp.eq.s32.totalorder %v112, %v498
    %vm500 = vcmp.eq.s32.totalorder %v113, %v498
    %v501 = vsel %vm499, 1, 0
    %v502 = vsel %vm500, 1, 0
    %v503 = vcvt.s32.f32 %v501
    %v504 = vcvt.s32.f32 %v502
    %v505 = vpack.c.bf16 %v503, %v503
    %v506 = vpack.c.bf16 %v504, %v504
    %507 = vmatprep.subr.bf16.mxu0 0
    %508 = vmatpush1.bf16.msra.mxu0 %v358
    %509 = vmatprep.subr.bf16.mxu0 0
    %510 = vmatpush1.bf16.msra.mxu0 %v357
    %511 = vmatprep.subr.bf16.mxu0 0
    %512 = vmatpush1.bf16.msra.mxu0 %v356
    %513 = vmatprep.subr.bf16.mxu0 0
    %514 = vmatpush1.bf16.msra.mxu0 %v355
    %515 = vmatprep.subr.bf16.mxu0 0
    %516 = vmatpush1.bf16.msra.mxu0 %v354
    %517 = vmatprep.subr.bf16.mxu0 0
    %518 = vmatpush1.bf16.msra.mxu0 %v353
    %519 = vmatprep.subr.bf16.mxu0 0
    %520 = vmatpush1.bf16.msra.mxu0 %v352
    %521 = vmatprep.subr.bf16.mxu0 0
    %522 = vmatpush1.bf16.msra.mxu0 %v351
    %523 = vmatprep.subr.bf16.mxu0 0
    %524 = vmatpush2.bf16.msra.mxu0 %v366
    %525 = vmatprep.subr.bf16.mxu0 0
    %526 = vmatpush2.bf16.msra.mxu0 %v365
    %527 = vmatprep.subr.bf16.mxu0 0
    %528 = vmatpush2.bf16.msra.mxu0 %v364
    %529 = vmatprep.subr.bf16.mxu0 0
    %530 = vmatpush2.bf16.msra.mxu0 %v363
    %531 = vmatprep.subr.bf16.mxu0 0
    %532 = vmatpush2.bf16.msra.mxu0 %v362
    %533 = vmatprep.subr.bf16.mxu0 0
    %534 = vmatpush2.bf16.msra.mxu0 %v361
    %535 = vmatprep.subr.bf16.mxu0 0
    %536 = vmatpush2.bf16.msra.mxu0 %v360
    %537 = vmatprep.subr.bf16.mxu0 0
    %538 = vmatpush2.bf16.msra.mxu0 %v359
    %539 = vmatprep.mubr.bf16.mxu0 %v506
    %540 = vmatmul.mubr.bf16.gmra.mxu0 %v505
    %v541 = vpop.f32.mrf.mxu0
    %v542 = vadd.f32 0.0, %v541
    %v543 = vpop.f32.mrf.mxu0
    %v544 = vpop.f32.mrf.mxu0
    %v545 = vpop.f32.mrf.mxu0
    %546 = vdwg.mxu0
    %v547 = vsub.f32 %v423, %v542
    %v548 = vmul.f32 %v547, %v547
    %549 = vadd.xlane.f32.xlu0 %v548
    %v550 = vpop.xlane.xlu0 %549
    %v551 = vpack.c.bf16 %v547, %v547
    %552 = vmatprep.subr.bf16.mxu0 %v181
    %553 = vmatpush1.bf16.msra.mxu0 %v180
    %554 = vmatprep.subr.bf16.mxu0 %v179
    %555 = vmatpush1.bf16.msra.mxu0 %v178
    %556 = vmatprep.subr.bf16.mxu0 %v177
    %557 = vmatpush1.bf16.msra.mxu0 %v176
    %558 = vmatprep.subr.bf16.mxu0 %v175
    %559 = vmatpush1.bf16.msra.mxu0 %v174
    %560 = vmatprep.subr.bf16.mxu0 %v173
    %561 = vmatpush1.bf16.msra.mxu0 %v172
    %562 = vmatprep.subr.bf16.mxu0 %v171
    %563 = vmatpush1.bf16.msra.mxu0 %v170
    %564 = vmatprep.subr.bf16.mxu0 %v169
    %565 = vmatpush1.bf16.msra.mxu0 %v168
    %566 = vmatprep.subr.bf16.mxu0 %v167
    %567 = vmatpush1.bf16.msra.mxu0 %v166
    %568 = vmatprep.subr.bf16.mxu0 0
    %569 = vmatpush2.bf16.msra.mxu0 0
    %570 = vmatprep.subr.bf16.mxu0 0
    %571 = vmatpush2.bf16.msra.mxu0 0
    %572 = vmatprep.subr.bf16.mxu0 0
    %573 = vmatpush2.bf16.msra.mxu0 0
    %574 = vmatprep.subr.bf16.mxu0 0
    %575 = vmatpush2.bf16.msra.mxu0 0
    %576 = vmatprep.subr.bf16.mxu0 0
    %577 = vmatpush2.bf16.msra.mxu0 0
    %578 = vmatprep.subr.bf16.mxu0 0
    %579 = vmatpush2.bf16.msra.mxu0 0
    %580 = vmatprep.subr.bf16.mxu0 0
    %581 = vmatpush2.bf16.msra.mxu0 0
    %582 = vmatprep.subr.bf16.mxu0 0
    %583 = vmatpush2.bf16.msra.mxu0 0
    %584 = vmatprep.mubr.bf16.mxu0 0
    %585 = vmatmul.mubr.bf16.gmra.mxu0 %v551
    %v586 = vpop.f32.mrf.mxu0
    %v587 = vadd.f32 0.0, %v586
    %v588 = vpop.f32.mrf.mxu0
    %v589 = vadd.f32 0.0, %v588
    %v590 = vpop.f32.mrf.mxu0
    %v591 = vpop.f32.mrf.mxu0
    %592 = vdwg.mxu0
    %v593 = vadd.f32 %v550, %v243
    %v594 = vadd.f32 %v550, %v247
    %v595 = vadd.f32 %v593, %v587
    %v596 = vadd.f32 %v594, %v589
    %s597 = scalar_lea.vmem [#allocation9], 32
    %598 = vst [vmem:[%s597] sm:$0xff] %v595
    %599 = vst [vmem:[%s597 + $0x8] sm:$0xff] %v596
    %v600 = vmin.f32 %v595, %v596
    %601 = vmin.xlane.f32.xlu0 %v600
    %v602 = vpop.xlane.xlu0 %601
    %vm603 = vcmp.eq.f32.partialorder %v595, %v602
    %vm604 = vcmp.eq.f32.partialorder %v596, %v602
    %v605 = vsel %vm603, %v112, 256
    %v606 = vsel %vm604, %v113, 256
    %vm607 = vcmp.lt.s32.totalorder %v605, %v606
    %v608 = vsel %vm607, %v605, %v606
    %v609 = vand.u32 %v608, 65535
    %v610 = vshra.s32 %v608, 16
    %v611 = vcvt.s32.f32 %v609
    %v612 = vcvt.s32.f32 %v610
    %613 = vmin.xlane.f32.xlu0 %v612
    %v614 = vpop.xlane.xlu0 %613
    %vm615 = vcmp.eq.f32.partialorder %v612, %v614
    %v616 = vsel %vm615, %v611, inf
    %617 = vmin.xlane.f32.xlu0 %v616
    %v618 = vpop.xlane.xlu0 %617
    %v619 = vcvt.f32.s32 %v618
    %v620 = vcvt.f32.s32 %v614
    %v621 = vshll.u32 %v620, 16
    %v622 = vadd.s32 %v621, %v619
    %vm623 = vcmp.eq.s32.totalorder %v112, %v622
    %vm624 = vcmp.eq.s32.totalorder %v113, %v622
    %v625 = vsel %vm623, 1, 0
    %v626 = vsel %vm624, 1, 0
    %v627 = vcvt.s32.f32 %v625
    %v628 = vcvt.s32.f32 %v626
    %v629 = vpack.c.bf16 %v627, %v627
    %v630 = vpack.c.bf16 %v628, %v628
    %631 = vmatprep.subr.bf16.mxu0 0
    %632 = vmatpush1.bf16.msra.mxu0 %v358
    %633 = vmatprep.subr.bf16.mxu0 0
    %634 = vmatpush1.bf16.msra.mxu0 %v357
    %635 = vmatprep.subr.bf16.mxu0 0
    %636 = vmatpush1.bf16.msra.mxu0 %v356
    %637 = vmatprep.subr.bf16.mxu0 0
    %638 = vmatpush1.bf16.msra.mxu0 %v355
    %639 = vmatprep.subr.bf16.mxu0 0
    %640 = vmatpush1.bf16.msra.mxu0 %v354
    %641 = vmatprep.subr.bf16.mxu0 0
    %642 = vmatpush1.bf16.msra.mxu0 %v353
    %643 = vmatprep.subr.bf16.mxu0 0
    %644 = vmatpush1.bf16.msra.mxu0 %v352
    %645 = vmatprep.subr.bf16.mxu0 0
    %646 = vmatpush1.bf16.msra.mxu0 %v351
    %647 = vmatprep.subr.bf16.mxu0 0
    %648 = vmatpush2.bf16.msra.mxu0 %v366
    %649 = vmatprep.subr.bf16.mxu0 0
    %650 = vmatpush2.bf16.msra.mxu0 %v365
    %651 = vmatprep.subr.bf16.mxu0 0
    %652 = vmatpush2.bf16.msra.mxu0 %v364
    %653 = vmatprep.subr.bf16.mxu0 0
    %654 = vmatpush2.bf16.msra.mxu0 %v363
    %655 = vmatprep.subr.bf16.mxu0 0
    %656 = vmatpush2.bf16.msra.mxu0 %v362
    %657 = vmatprep.subr.bf16.mxu0 0
    %658 = vmatpush2.bf16.msra.mxu0 %v361
    %659 = vmatprep.subr.bf16.mxu0 0
    %660 = vmatpush2.bf16.msra.mxu0 %v360
    %661 = vmatprep.subr.bf16.mxu0 0
    %662 = vmatpush2.bf16.msra.mxu0 %v359
    %663 = vmatprep.mubr.bf16.mxu0 %v630
    %664 = vmatmul.mubr.bf16.gmra.mxu0 %v629
    %v665 = vpop.f32.mrf.mxu0
    %v666 = vadd.f32 0.0, %v665
    %v667 = vpop.f32.mrf.mxu0
    %v668 = vpop.f32.mrf.mxu0
    %v669 = vpop.f32.mrf.mxu0
    %670 = vdwg.mxu0
    %v671 = vsub.f32 %v547, %v666
    %v672 = vsub.f32 %v61, %v671
    %673 = vst [vmem:[#allocation8] sm:$0xff] %v672
    // Predicated region
    $region30: #{tpu_custom_call.1} parent=1 // pred_check
      _
    $region31: #{tpu_custom_call.1} parent=1 // pred_check_branch
      %675 = sbr.rel (0) target = $region33
    $region32: #{tpu_custom_call.1} parent=1 // pred_region
      %s677 = ssub.s32 128, 128
      %678 = vsyncadd [#allocation4], %s677
      %s680 = sshll.u32 [#allocation8], 4
      %s681 = int_to_ptr.vmem [resolvable:$true] %s680
      %683 = dma.vmem_to_hbm [thread:$0]  %s681, 128, %s4, [#allocation4]
    $region33: #{tpu_custom_call.1} parent=1 // pred_fallthru
      _
    // Predicated region
    $region34: #{tpu_custom_call.1} parent=1 // pred_check
      _
    $region35: #{tpu_custom_call.1} parent=1 // pred_check_branch
      %685 = sbr.rel (0) target = $region37
    $region36: #{tpu_custom_call.1} parent=1 // pred_region
      %s687 = ssub.s32 768, 768
      %688 = vsyncadd [#allocation10], %s687
      %s689 = sshll.u32 [#allocation9], 4
      %s690 = int_to_ptr.vmem [resolvable:$true] %s689
      %695 = dma.vmem_to_hbm [thread:$0]  %s690, 768, %s5, [#allocation10], 256, 256, 16
    $region37: #{tpu_custom_call.1} parent=1 // pred_fallthru
      _
    // Predicated region
    $region38: #{tpu_custom_call.1} parent=1 // pred_check
      _
    $region39: #{tpu_custom_call.1} parent=1 // pred_check_branch
      %697 = sbr.rel (0) target = $region41
    $region40: #{tpu_custom_call.1} parent=1 // pred_region
      %698 = dma.done [#allocation4], 128
    $region41: #{tpu_custom_call.1} parent=1 // pred_fallthru
      _
    // Predicated region
    $region42: #{tpu_custom_call.1} parent=1 // pred_check
      _
    $region43: #{tpu_custom_call.1} parent=1 // pred_check_branch
      %700 = sbr.rel (0) target = $region45
    $region44: #{tpu_custom_call.1} parent=1 // pred_region
      %701 = dma.done [#allocation10], 768
    $region45: #{tpu_custom_call.1} parent=1 // pred_fallthru
      _
    %702 = vsyncpa [#allocation3], 1
    %703 = vsyncpa [#allocation6], 1
    %704 = vsyncpa [#allocation4], 1
    %705 = vsyncpa [#allocation10], 1

// kernel: tpu_custom_call.1
$region0: #{tpu_custom_call.1}
  #allocation0 [shape = 'u32[]', space=smem, size = 0x4, offset = 0x4, fixed_abs, tag = 'smem constant byte address 0x4 - core index']
  #allocation1 [shape = 'u32[144,128]{1,0:T(1,128)}', space=vmem, size = 0x12000, scoped, tag = 'internal scratch']
  %s0 = inlined_call_operand.hbm [shape: f32[8,128], index: 0, kind: input, shape index: {}]
  %s1 = inlined_call_operand.hbm [shape: bf16[128,256], index: 1, kind: input, shape index: {}]
  %s2 = inlined_call_operand.hbm [shape: bf16[256,128], index: 2, kind: input, shape index: {}]
  %s3 = inlined_call_operand.vmem [shape: f32[1,256], index: 3, kind: input, shape index: {}]
  %s4 = inlined_call_operand.hbm [shape: f32[8,128], index: 4, kind: output, shape index: {0}]
  %s5 = inlined_call_operand.hbm [shape: f32[3,8,256], index: 5, kind: output, shape index: {1}]
  %6 = xla_tuple %s4, %s5
  %s7 = sld [smem:[#allocation0]]
  $region46: #{tpu_custom_call.1} parent=0
    _
  %s9 = ssub.s32 1, %s7
  %s10 = scalar_select 0, %s9, %s7
  $region1: #{tpu_custom_call.1} parent=0
    #allocation2 [shape = 'u8[4096]{0}', space=vmem, size = 0x1000, scoped, tag = 'input window, operand 0, single buffered']
    #allocation3 [shape = 's32[1]{0}', space=sflag, size = 0x4, scoped, tag = 'scoped memory for tpu_custom_call.1']
    #allocation4 [shape = 's32[1]{0}', space=sflag, size = 0x4, scoped, tag = 'scoped memory for tpu_custom_call.1']
    #allocation5 [shape = 'u8[65536]{0}', space=vmem, size = 0x10000, scoped, tag = 'input window, operand 1, single buffered']
    #allocation6 [shape = 's32[1]{0}', space=sflag, size = 0x4, scoped, tag = 'scoped memory for tpu_custom_call.1']
    #allocation7 [shape = 'u8[65536]{0}', space=vmem, size = 0x10000, scoped, tag = 'input window, operand 2, single buffered']
    #allocation8 [shape = 'u8[4096]{0}', space=vmem, size = 0x1000, scoped, tag = 'output window, operand 0, single buffered']
    #allocation9 [shape = 'u8[24576]{0}', space=vmem, size = 0x6000, scoped, tag = 'output window, operand 1, single buffered']
    #allocation10 [shape = 's32[1]{0}', space=sflag, size = 0x4, scoped, tag = 'scoped memory for tpu_custom_call.1']
    %11 = vsyncpa [#allocation3], 0
    %12 = vsyncpa [#allocation6], 0
    %13 = vsyncpa [#allocation4], 0
    %14 = vsyncpa [#allocation10], 0
    // Predicated region
    $region2: #{tpu_custom_call.1} parent=1 // pred_check
      _
    $region3: #{tpu_custom_call.1} parent=1 // pred_check_branch
      %16 = sbr.rel (0) target = $region5
    $region4: #{tpu_custom_call.1} parent=1 // pred_region
      %s18 = ssub.s32 128, 128
      %19 = vsyncadd [#allocation3], %s18
      %s21 = sshll.u32 [#allocation2], 4
      %s22 = int_to_ptr.vmem [resolvable:$true] %s21
      %24 = dma.hbm_to_vmem [thread:$0]  %s0, 128, %s22, [#allocation3]
    $region5: #{tpu_custom_call.1} parent=1 // pred_fallthru
      _
    // Predicated region
    $region6: #{tpu_custom_call.1} parent=1 // pred_check
      _
    $region7: #{tpu_custom_call.1} parent=1 // pred_check_branch
      %26 = sbr.rel (0) target = $region9
    $region8: #{tpu_custom_call.1} parent=1 // pred_region
      %s28 = ssub.s32 2048, 2048
      %29 = vsyncadd [#allocation6], %s28
      %s30 = sshll.u32 [#allocation5], 4
      %s31 = int_to_ptr.vmem [resolvable:$true] %s30
      %36 = dma.hbm_to_vmem [thread:$0]  %s1, 2048, %s31, [#allocation6], 128, 128, 8
    $region9: #{tpu_custom_call.1} parent=1 // pred_fallthru
      _
    // Predicated region
    $region10: #{tpu_custom_call.1} parent=1 // pred_check
      _
    $region11: #{tpu_custom_call.1} parent=1 // pred_check_branch
      %38 = sbr.rel (0) target = $region13
    $region12: #{tpu_custom_call.1} parent=1 // pred_region
      %s40 = ssub.s32 2048, 2048
      %41 = vsyncadd [#allocation6], %s40
      %s42 = sshll.u32 [#allocation7], 4
      %s43 = int_to_ptr.vmem [resolvable:$true] %s42
      %48 = dma.hbm_to_vmem [thread:$0]  %s2, 2048, %s43, [#allocation6], 64, 64, 4
    $region13: #{tpu_custom_call.1} parent=1 // pred_fallthru
      _
    // Predicated region
    $region14: #{tpu_custom_call.1} parent=1 // pred_check
      _
    $region15: #{tpu_custom_call.1} parent=1 // pred_check_branch
      %50 = sbr.rel (0) target = $region17
    $region16: #{tpu_custom_call.1} parent=1 // pred_region
      _
    $region17: #{tpu_custom_call.1} parent=1 // pred_fallthru
      _
    // Predicated region
    $region18: #{tpu_custom_call.1} parent=1 // pred_check
      _
    $region19: #{tpu_custom_call.1} parent=1 // pred_check_branch
      %52 = sbr.rel (0) target = $region21
    $region20: #{tpu_custom_call.1} parent=1 // pred_region
      %53 = dma.done [#allocation3], 128
    $region21: #{tpu_custom_call.1} parent=1 // pred_fallthru
      _
    // Predicated region
    $region22: #{tpu_custom_call.1} parent=1 // pred_check
      _
    $region23: #{tpu_custom_call.1} parent=1 // pred_check_branch
      %55 = sbr.rel (0) target = $region25
    $region24: #{tpu_custom_call.1} parent=1 // pred_region
      %56 = dma.done [#allocation6], 2048
    $region25: #{tpu_custom_call.1} parent=1 // pred_fallthru
      _
    // Predicated region
    $region26: #{tpu_custom_call.1} parent=1 // pred_check
      _
    $region27: #{tpu_custom_call.1} parent=1 // pred_check_branch
      %58 = sbr.rel (0) target = $region29
    $region28: #{tpu_custom_call.1} parent=1 // pred_region
      %59 = dma.done [#allocation6], 2048
    $region29: #{tpu_custom_call.1} parent=1 // pred_fallthru
      _
    %v61 = vld [vmem:[#allocation2] sm:$0xff]
    %v62 = vld [vmem:[#allocation5] sm:$0xff]
    %v63 = vld [vmem:[#allocation5 + $0x8] sm:$0xff]
    %v64 = vld [vmem:[#allocation5 + $0x10] sm:$0xff]
    %v65 = vld [vmem:[#allocation5 + $0x18] sm:$0xff]
    %v66 = vld [vmem:[#allocation5 + $0x20] sm:$0xff]
    %v67 = vld [vmem:[#allocation5 + $0x28] sm:$0xff]
    %v68 = vld [vmem:[#allocation5 + $0x30] sm:$0xff]
    %v69 = vld [vmem:[#allocation5 + $0x38] sm:$0xff]
    %v70 = vld [vmem:[#allocation5 + $0x40] sm:$0xff]
    %v71 = vld [vmem:[#allocation5 + $0x48] sm:$0xff]
    %v72 = vld [vmem:[#allocation5 + $0x50] sm:$0xff]
    %v73 = vld [vmem:[#allocation5 + $0x58] sm:$0xff]
    %v74 = vld [vmem:[#allocation5 + $0x60] sm:$0xff]
    %v75 = vld [vmem:[#allocation5 + $0x68] sm:$0xff]
    %v76 = vld [vmem:[#allocation5 + $0x70] sm:$0xff]
    %v77 = vld [vmem:[#allocation5 + $0x78] sm:$0xff]
    %v78 = vld [vmem:[#allocation7] sm:$0xf]
    %v79 = vld [vmem:[#allocation7 + $0x4] sm:$0xf]
    %v80 = vld [vmem:[#allocation7 + $0x8] sm:$0xf]
    %v81 = vld [vmem:[#allocation7 + $0xc] sm:$0xf]
    %v82 = vld [vmem:[#allocation7 + $0x10] sm:$0xf]
    %v83 = vld [vmem:[#allocation7 + $0x14] sm:$0xf]
    %v84 = vld [vmem:[#allocation7 + $0x18] sm:$0xf]
    %v85 = vld [vmem:[#allocation7 + $0x1c] sm:$0xf]
    %v86 = vld [vmem:[#allocation7 + $0x20] sm:$0xf]
    %v87 = vld [vmem:[#allocation7 + $0x24] sm:$0xf]
    %v88 = vld [vmem:[#allocation7 + $0x28] sm:$0xf]
    %v89 = vld [vmem:[#allocation7 + $0x2c] sm:$0xf]
    %v90 = vld [vmem:[#allocation7 + $0x30] sm:$0xf]
    %v91 = vld [vmem:[#allocation7 + $0x34] sm:$0xf]
    %v92 = vld [vmem:[#allocation7 + $0x38] sm:$0xf]
    %v93 = vld [vmem:[#allocation7 + $0x3c] sm:$0xf]
    %v94 = vld [vmem:[#allocation7 + $0x40] sm:$0xf]
    %v95 = vld [vmem:[#allocation7 + $0x44] sm:$0xf]
    %v96 = vld [vmem:[#allocation7 + $0x48] sm:$0xf]
    %v97 = vld [vmem:[#allocation7 + $0x4c] sm:$0xf]
    %v98 = vld [vmem:[#allocation7 + $0x50] sm:$0xf]
    %v99 = vld [vmem:[#allocation7 + $0x54] sm:$0xf]
    %v100 = vld [vmem:[#allocation7 + $0x58] sm:$0xf]
    %v101 = vld [vmem:[#allocation7 + $0x5c] sm:$0xf]
    %v102 = vld [vmem:[#allocation7 + $0x60] sm:$0xf]
    %v103 = vld [vmem:[#allocation7 + $0x64] sm:$0xf]
    %v104 = vld [vmem:[#allocation7 + $0x68] sm:$0xf]
    %v105 = vld [vmem:[#allocation7 + $0x6c] sm:$0xf]
    %v106 = vld [vmem:[#allocation7 + $0x70] sm:$0xf]
    %v107 = vld [vmem:[#allocation7 + $0x74] sm:$0xf]
    %v108 = vld [vmem:[#allocation7 + $0x78] sm:$0xf]
    %v109 = vld [vmem:[#allocation7 + $0x7c] sm:$0xf]
    %v110 = vld [vmem:[%s3] sm:$0x3]
    %v111 = vlaneseq
    %v112 = vand.u32 %v111, 127
    %v113 = vadd.s32 %v112, 128
    %v114 = vmul.f32 %v61, %v61
    %115 = vadd.xlane.f32.xlu0 %v114
    %v116 = vpop.xlane.xlu0 %115
    %v117 = vpack.c.bf16 %v61, %v61
    %v134 = vunpack.c.l.b16 %v62
    %v135 = vunpack.c.h.b16 %v62
    %v136 = vunpack.c.l.b16 %v63
    %v137 = vunpack.c.h.b16 %v63
    %v138 = vunpack.c.l.b16 %v64
    %v139 = vunpack.c.h.b16 %v64
    %v140 = vunpack.c.l.b16 %v65
    %v141 = vunpack.c.h.b16 %v65
    %v142 = vunpack.c.l.b16 %v66
    %v143 = vunpack.c.h.b16 %v66
    %v144 = vunpack.c.l.b16 %v67
    %v145 = vunpack.c.h.b16 %v67
    %v146 = vunpack.c.l.b16 %v68
    %v147 = vunpack.c.h.b16 %v68
    %v148 = vunpack.c.l.b16 %v69
    %v149 = vunpack.c.h.b16 %v69
    %v150 = vunpack.c.l.b16 %v70
    %v151 = vunpack.c.h.b16 %v70
    %v152 = vunpack.c.l.b16 %v71
    %v153 = vunpack.c.h.b16 %v71
    %v154 = vunpack.c.l.b16 %v72
    %v155 = vunpack.c.h.b16 %v72
    %v156 = vunpack.c.l.b16 %v73
    %v157 = vunpack.c.h.b16 %v73
    %v158 = vunpack.c.l.b16 %v74
    %v159 = vunpack.c.h.b16 %v74
    %v160 = vunpack.c.l.b16 %v75
    %v161 = vunpack.c.h.b16 %v75
    %v162 = vunpack.c.l.b16 %v76
    %v163 = vunpack.c.h.b16 %v76
    %v164 = vunpack.c.l.b16 %v77
    %v165 = vunpack.c.h.b16 %v77
    %v166 = vpack.c.b16 %v136, %v134
    %v167 = vpack.c.b16 %v137, %v135
    %v168 = vpack.c.b16 %v140, %v138
    %v169 = vpack.c.b16 %v141, %v139
    %v170 = vpack.c.b16 %v144, %v142
    %v171 = vpack.c.b16 %v145, %v143
    %v172 = vpack.c.b16 %v148, %v146
    %v173 = vpack.c.b16 %v149, %v147
    %v174 = vpack.c.b16 %v152, %v150
    %v175 = vpack.c.b16 %v153, %v151
    %v176 = vpack.c.b16 %v156, %v154
    %v177 = vpack.c.b16 %v157, %v155
    %v178 = vpack.c.b16 %v160, %v158
    %v179 = vpack.c.b16 %v161, %v159
    %v180 = vpack.c.b16 %v164, %v162
    %v181 = vpack.c.b16 %v165, %v163
    %198 = vmatprep.subr.bf16.mxu0 %v181
    %199 = vmatpush1.bf16.msra.mxu0 %v180
    %200 = vmatprep.subr.bf16.mxu0 %v179
    %201 = vmatpush1.bf16.msra.mxu0 %v178
    %202 = vmatprep.subr.bf16.mxu0 %v177
    %203 = vmatpush1.bf16.msra.mxu0 %v176
    %204 = vmatprep.subr.bf16.mxu0 %v175
    %205 = vmatpush1.bf16.msra.mxu0 %v174
    %206 = vmatprep.subr.bf16.mxu0 %v173
    %207 = vmatpush1.bf16.msra.mxu0 %v172
    %208 = vmatprep.subr.bf16.mxu0 %v171
    %209 = vmatpush1.bf16.msra.mxu0 %v170
    %210 = vmatprep.subr.bf16.mxu0 %v169
    %211 = vmatpush1.bf16.msra.mxu0 %v168
    %212 = vmatprep.subr.bf16.mxu0 %v167
    %213 = vmatpush1.bf16.msra.mxu0 %v166
    %214 = vmatprep.subr.bf16.mxu0 0
    %215 = vmatpush2.bf16.msra.mxu0 0
    %216 = vmatprep.subr.bf16.mxu0 0
    %217 = vmatpush2.bf16.msra.mxu0 0
    %218 = vmatprep.subr.bf16.mxu0 0
    %219 = vmatpush2.bf16.msra.mxu0 0
    %220 = vmatprep.subr.bf16.mxu0 0
    %221 = vmatpush2.bf16.msra.mxu0 0
    %222 = vmatprep.subr.bf16.mxu0 0
    %223 = vmatpush2.bf16.msra.mxu0 0
    %224 = vmatprep.subr.bf16.mxu0 0
    %225 = vmatpush2.bf16.msra.mxu0 0
    %226 = vmatprep.subr.bf16.mxu0 0
    %227 = vmatpush2.bf16.msra.mxu0 0
    %228 = vmatprep.subr.bf16.mxu0 0
    %229 = vmatpush2.bf16.msra.mxu0 0
    %230 = vmatprep.mubr.bf16.mxu0 0
    %231 = vmatmul.mubr.bf16.gmra.mxu0 %v117
    %v232 = vpop.f32.mrf.mxu0
    %v233 = vadd.f32 0.0, %v232
    %v234 = vpop.f32.mrf.mxu0
    %v235 = vadd.f32 0.0, %v234
    %v236 = vpop.f32.mrf.mxu0
    %v237 = vpop.f32.mrf.mxu0
    %238 = vdwg.mxu0
    %v240 = vlaneseq
    %v241 = vshrl.u32 %v240, 7
    %v242 = vsub.s32 0, %v241
    %v243 = vrot.slane %v110, %v242
    %v244 = vlaneseq
    %v245 = vshrl.u32 %v244, 7
    %v246 = vsub.s32 1, %v245
    %v247 = vrot.slane %v110, %v246
    %v250 = vadd.f32 %v116, %v243
    %v251 = vadd.f32 %v116, %v247
    %v252 = vadd.f32 %v250, %v233
    %v253 = vadd.f32 %v251, %v235
    %254 = vst [vmem:[#allocation9] sm:$0xff] %v252
    %255 = vst [vmem:[#allocation9 + $0x8] sm:$0xff] %v253
    %v256 = vmin.f32 %v252, %v253
    %257 = vmin.xlane.f32.xlu0 %v256
    %v258 = vpop.xlane.xlu0 %257
    %vm259 = vcmp.eq.f32.partialorder %v252, %v258
    %vm260 = vcmp.eq.f32.partialorder %v253, %v258
    %v261 = vsel %vm259, %v112, 256
    %v262 = vsel %vm260, %v113, 256
    %vm263 = vcmp.lt.s32.totalorder %v261, %v262
    %v264 = vsel %vm263, %v261, %v262
    %v265 = vand.u32 %v264, 65535
    %v266 = vshra.s32 %v264, 16
    %v267 = vcvt.s32.f32 %v265
    %v268 = vcvt.s32.f32 %v266
    %269 = vmin.xlane.f32.xlu0 %v268
    %v270 = vpop.xlane.xlu0 %269
    %vm271 = vcmp.eq.f32.partialorder %v268, %v270
    %v272 = vsel %vm271, %v267, inf
    %273 = vmin.xlane.f32.xlu0 %v272
    %v274 = vpop.xlane.xlu0 %273
    %v275 = vcvt.f32.s32 %v274
    %v276 = vcvt.f32.s32 %v270
    %v277 = vshll.u32 %v276, 16
    %v278 = vadd.s32 %v277, %v275
    %vm279 = vcmp.eq.s32.totalorder %v112, %v278
    %vm280 = vcmp.eq.s32.totalorder %v113, %v278
    %v281 = vsel %vm279, 1, 0
    %v282 = vsel %vm280, 1, 0
    %v283 = vcvt.s32.f32 %v281
    %v284 = vcvt.s32.f32 %v282
    %v285 = vpack.c.bf16 %v283, %v283
    %v286 = vpack.c.bf16 %v284, %v284
    %v319 = vunpack.c.l.b16 %v78
    %v320 = vunpack.c.l.b16 %v79
    %v321 = vunpack.c.l.b16 %v80
    %v322 = vunpack.c.l.b16 %v81
    %v323 = vunpack.c.l.b16 %v82
    %v324 = vunpack.c.l.b16 %v83
    %v325 = vunpack.c.l.b16 %v84
    %v326 = vunpack.c.l.b16 %v85
    %v327 = vunpack.c.l.b16 %v86
    %v328 = vunpack.c.l.b16 %v87
    %v329 = vunpack.c.l.b16 %v88
    %v330 = vunpack.c.l.b16 %v89
    %v331 = vunpack.c.l.b16 %v90
    %v332 = vunpack.c.l.b16 %v91
    %v333 = vunpack.c.l.b16 %v92
    %v334 = vunpack.c.l.b16 %v93
    %v335 = vunpack.c.l.b16 %v94
    %v336 = vunpack.c.l.b16 %v95
    %v337 = vunpack.c.l.b16 %v96
    %v338 = vunpack.c.l.b16 %v97
    %v339 = vunpack.c.l.b16 %v98
    %v340 = vunpack.c.l.b16 %v99
    %v341 = vunpack.c.l.b16 %v100
    %v342 = vunpack.c.l.b16 %v101
    %v343 = vunpack.c.l.b16 %v102
    %v344 = vunpack.c.l.b16 %v103
    %v345 = vunpack.c.l.b16 %v104
    %v346 = vunpack.c.l.b16 %v105
    %v347 = vunpack.c.l.b16 %v106
    %v348 = vunpack.c.l.b16 %v107
    %v349 = vunpack.c.l.b16 %v108
    %v350 = vunpack.c.l.b16 %v109
    %v351 = vpack.c.b16 %v320, %v319
    %v352 = vpack.c.b16 %v322, %v321
    %v353 = vpack.c.b16 %v324, %v323
    %v354 = vpack.c.b16 %v326, %v325
    %v355 = vpack.c.b16 %v328, %v327
    %v356 = vpack.c.b16 %v330, %v329
    %v357 = vpack.c.b16 %v332, %v331
    %v358 = vpack.c.b16 %v334, %v333
    %v359 = vpack.c.b16 %v336, %v335
    %v360 = vpack.c.b16 %v338, %v337
    %v361 = vpack.c.b16 %v340, %v339
    %v362 = vpack.c.b16 %v342, %v341
    %v363 = vpack.c.b16 %v344, %v343
    %v364 = vpack.c.b16 %v346, %v345
    %v365 = vpack.c.b16 %v348, %v347
    %v366 = vpack.c.b16 %v350, %v349
    %383 = vmatprep.subr.bf16.mxu0 0
    %384 = vmatpush1.bf16.msra.mxu0 %v358
    %385 = vmatprep.subr.bf16.mxu0 0
    %386 = vmatpush1.bf16.msra.mxu0 %v357
    %387 = vmatprep.subr.bf16.mxu0 0
    %388 = vmatpush1.bf16.msra.mxu0 %v356
    %389 = vmatprep.subr.bf16.mxu0 0
    %390 = vmatpush1.bf16.msra.mxu0 %v355
    %391 = vmatprep.subr.bf16.mxu0 0
    %392 = vmatpush1.bf16.msra.mxu0 %v354
    %393 = vmatprep.subr.bf16.mxu0 0
    %394 = vmatpush1.bf16.msra.mxu0 %v353
    %395 = vmatprep.subr.bf16.mxu0 0
    %396 = vmatpush1.bf16.msra.mxu0 %v352
    %397 = vmatprep.subr.bf16.mxu0 0
    %398 = vmatpush1.bf16.msra.mxu0 %v351
    %399 = vmatprep.subr.bf16.mxu0 0
    %400 = vmatpush2.bf16.msra.mxu0 %v366
    %401 = vmatprep.subr.bf16.mxu0 0
    %402 = vmatpush2.bf16.msra.mxu0 %v365
    %403 = vmatprep.subr.bf16.mxu0 0
    %404 = vmatpush2.bf16.msra.mxu0 %v364
    %405 = vmatprep.subr.bf16.mxu0 0
    %406 = vmatpush2.bf16.msra.mxu0 %v363
    %407 = vmatprep.subr.bf16.mxu0 0
    %408 = vmatpush2.bf16.msra.mxu0 %v362
    %409 = vmatprep.subr.bf16.mxu0 0
    %410 = vmatpush2.bf16.msra.mxu0 %v361
    %411 = vmatprep.subr.bf16.mxu0 0
    %412 = vmatpush2.bf16.msra.mxu0 %v360
    %413 = vmatprep.subr.bf16.mxu0 0
    %414 = vmatpush2.bf16.msra.mxu0 %v359
    %415 = vmatprep.mubr.bf16.mxu0 %v286
    %416 = vmatmul.mubr.bf16.gmra.mxu0 %v285
    %v417 = vpop.f32.mrf.mxu0
    %v418 = vadd.f32 0.0, %v417
    %v419 = vpop.f32.mrf.mxu0
    %v420 = vpop.f32.mrf.mxu0
    %v421 = vpop.f32.mrf.mxu0
    %422 = vdwg.mxu0
    %v423 = vsub.f32 %v61, %v418
    %v424 = vmul.f32 %v423, %v423
    %425 = vadd.xlane.f32.xlu0 %v424
    %v426 = vpop.xlane.xlu0 %425
    %v427 = vpack.c.bf16 %v423, %v423
    %428 = vmatprep.subr.bf16.mxu0 %v181
    %429 = vmatpush1.bf16.msra.mxu0 %v180
    %430 = vmatprep.subr.bf16.mxu0 %v179
    %431 = vmatpush1.bf16.msra.mxu0 %v178
    %432 = vmatprep.subr.bf16.mxu0 %v177
    %433 = vmatpush1.bf16.msra.mxu0 %v176
    %434 = vmatprep.subr.bf16.mxu0 %v175
    %435 = vmatpush1.bf16.msra.mxu0 %v174
    %436 = vmatprep.subr.bf16.mxu0 %v173
    %437 = vmatpush1.bf16.msra.mxu0 %v172
    %438 = vmatprep.subr.bf16.mxu0 %v171
    %439 = vmatpush1.bf16.msra.mxu0 %v170
    %440 = vmatprep.subr.bf16.mxu0 %v169
    %441 = vmatpush1.bf16.msra.mxu0 %v168
    %442 = vmatprep.subr.bf16.mxu0 %v167
    %443 = vmatpush1.bf16.msra.mxu0 %v166
    %444 = vmatprep.subr.bf16.mxu0 0
    %445 = vmatpush2.bf16.msra.mxu0 0
    %446 = vmatprep.subr.bf16.mxu0 0
    %447 = vmatpush2.bf16.msra.mxu0 0
    %448 = vmatprep.subr.bf16.mxu0 0
    %449 = vmatpush2.bf16.msra.mxu0 0
    %450 = vmatprep.subr.bf16.mxu0 0
    %451 = vmatpush2.bf16.msra.mxu0 0
    %452 = vmatprep.subr.bf16.mxu0 0
    %453 = vmatpush2.bf16.msra.mxu0 0
    %454 = vmatprep.subr.bf16.mxu0 0
    %455 = vmatpush2.bf16.msra.mxu0 0
    %456 = vmatprep.subr.bf16.mxu0 0
    %457 = vmatpush2.bf16.msra.mxu0 0
    %458 = vmatprep.subr.bf16.mxu0 0
    %459 = vmatpush2.bf16.msra.mxu0 0
    %460 = vmatprep.mubr.bf16.mxu0 0
    %461 = vmatmul.mubr.bf16.gmra.mxu0 %v427
    %v462 = vpop.f32.mrf.mxu0
    %v463 = vadd.f32 0.0, %v462
    %v464 = vpop.f32.mrf.mxu0
    %v465 = vadd.f32 0.0, %v464
    %v466 = vpop.f32.mrf.mxu0
    %v467 = vpop.f32.mrf.mxu0
    %468 = vdwg.mxu0
    %v469 = vadd.f32 %v426, %v243
    %v470 = vadd.f32 %v426, %v247
    %v471 = vadd.f32 %v469, %v463
    %v472 = vadd.f32 %v470, %v465
    %s473 = scalar_lea.vmem [#allocation9], 16
    %474 = vst [vmem:[%s473] sm:$0xff] %v471
    %475 = vst [vmem:[%s473 + $0x8] sm:$0xff] %v472
    %v476 = vmin.f32 %v471, %v472
    %477 = vmin.xlane.f32.xlu0 %v476
    %v478 = vpop.xlane.xlu0 %477
    %vm479 = vcmp.eq.f32.partialorder %v471, %v478
    %vm480 = vcmp.eq.f32.partialorder %v472, %v478
    %v481 = vsel %vm479, %v112, 256
    %v482 = vsel %vm480, %v113, 256
    %vm483 = vcmp.lt.s32.totalorder %v481, %v482
    %v484 = vsel %vm483, %v481, %v482
    %v485 = vand.u32 %v484, 65535
    %v486 = vshra.s32 %v484, 16
    %v487 = vcvt.s32.f32 %v485
    %v488 = vcvt.s32.f32 %v486
    %489 = vmin.xlane.f32.xlu0 %v488
    %v490 = vpop.xlane.xlu0 %489
    %vm491 = vcmp.eq.f32.partialorder %v488, %v490
    %v492 = vsel %vm491, %v487, inf
    %493 = vmin.xlane.f32.xlu0 %v492
    %v494 = vpop.xlane.xlu0 %493
    %v495 = vcvt.f32.s32 %v494
    %v496 = vcvt.f32.s32 %v490
    %v497 = vshll.u32 %v496, 16
    %v498 = vadd.s32 %v497, %v495
    %vm499 = vcmp.eq.s32.totalorder %v112, %v498
    %vm500 = vcmp.eq.s32.totalorder %v113, %v498
    %v501 = vsel %vm499, 1, 0
    %v502 = vsel %vm500, 1, 0
    %v503 = vcvt.s32.f32 %v501
    %v504 = vcvt.s32.f32 %v502
    %v505 = vpack.c.bf16 %v503, %v503
    %v506 = vpack.c.bf16 %v504, %v504
    %507 = vmatprep.subr.bf16.mxu0 0
    %508 = vmatpush1.bf16.msra.mxu0 %v358
    %509 = vmatprep.subr.bf16.mxu0 0
    %510 = vmatpush1.bf16.msra.mxu0 %v357
    %511 = vmatprep.subr.bf16.mxu0 0
    %512 = vmatpush1.bf16.msra.mxu0 %v356
    %513 = vmatprep.subr.bf16.mxu0 0
    %514 = vmatpush1.bf16.msra.mxu0 %v355
    %515 = vmatprep.subr.bf16.mxu0 0
    %516 = vmatpush1.bf16.msra.mxu0 %v354
    %517 = vmatprep.subr.bf16.mxu0 0
    %518 = vmatpush1.bf16.msra.mxu0 %v353
    %519 = vmatprep.subr.bf16.mxu0 0
    %520 = vmatpush1.bf16.msra.mxu0 %v352
    %521 = vmatprep.subr.bf16.mxu0 0
    %522 = vmatpush1.bf16.msra.mxu0 %v351
    %523 = vmatprep.subr.bf16.mxu0 0
    %524 = vmatpush2.bf16.msra.mxu0 %v366
    %525 = vmatprep.subr.bf16.mxu0 0
    %526 = vmatpush2.bf16.msra.mxu0 %v365
    %527 = vmatprep.subr.bf16.mxu0 0
    %528 = vmatpush2.bf16.msra.mxu0 %v364
    %529 = vmatprep.subr.bf16.mxu0 0
    %530 = vmatpush2.bf16.msra.mxu0 %v363
    %531 = vmatprep.subr.bf16.mxu0 0
    %532 = vmatpush2.bf16.msra.mxu0 %v362
    %533 = vmatprep.subr.bf16.mxu0 0
    %534 = vmatpush2.bf16.msra.mxu0 %v361
    %535 = vmatprep.subr.bf16.mxu0 0
    %536 = vmatpush2.bf16.msra.mxu0 %v360
    %537 = vmatprep.subr.bf16.mxu0 0
    %538 = vmatpush2.bf16.msra.mxu0 %v359
    %539 = vmatprep.mubr.bf16.mxu0 %v506
    %540 = vmatmul.mubr.bf16.gmra.mxu0 %v505
    %v541 = vpop.f32.mrf.mxu0
    %v542 = vadd.f32 0.0, %v541
    %v543 = vpop.f32.mrf.mxu0
    %v544 = vpop.f32.mrf.mxu0
    %v545 = vpop.f32.mrf.mxu0
    %546 = vdwg.mxu0
    %v547 = vsub.f32 %v423, %v542
    %v548 = vmul.f32 %v547, %v547
    %549 = vadd.xlane.f32.xlu0 %v548
    %v550 = vpop.xlane.xlu0 %549
    %v551 = vpack.c.bf16 %v547, %v547
    %552 = vmatprep.subr.bf16.mxu0 %v181
    %553 = vmatpush1.bf16.msra.mxu0 %v180
    %554 = vmatprep.subr.bf16.mxu0 %v179
    %555 = vmatpush1.bf16.msra.mxu0 %v178
    %556 = vmatprep.subr.bf16.mxu0 %v177
    %557 = vmatpush1.bf16.msra.mxu0 %v176
    %558 = vmatprep.subr.bf16.mxu0 %v175
    %559 = vmatpush1.bf16.msra.mxu0 %v174
    %560 = vmatprep.subr.bf16.mxu0 %v173
    %561 = vmatpush1.bf16.msra.mxu0 %v172
    %562 = vmatprep.subr.bf16.mxu0 %v171
    %563 = vmatpush1.bf16.msra.mxu0 %v170
    %564 = vmatprep.subr.bf16.mxu0 %v169
    %565 = vmatpush1.bf16.msra.mxu0 %v168
    %566 = vmatprep.subr.bf16.mxu0 %v167
    %567 = vmatpush1.bf16.msra.mxu0 %v166
    %568 = vmatprep.subr.bf16.mxu0 0
    %569 = vmatpush2.bf16.msra.mxu0 0
    %570 = vmatprep.subr.bf16.mxu0 0
    %571 = vmatpush2.bf16.msra.mxu0 0
    %572 = vmatprep.subr.bf16.mxu0 0
    %573 = vmatpush2.bf16.msra.mxu0 0
    %574 = vmatprep.subr.bf16.mxu0 0
    %575 = vmatpush2.bf16.msra.mxu0 0
    %576 = vmatprep.subr.bf16.mxu0 0
    %577 = vmatpush2.bf16.msra.mxu0 0
    %578 = vmatprep.subr.bf16.mxu0 0
    %579 = vmatpush2.bf16.msra.mxu0 0
    %580 = vmatprep.subr.bf16.mxu0 0
    %581 = vmatpush2.bf16.msra.mxu0 0
    %582 = vmatprep.subr.bf16.mxu0 0
    %583 = vmatpush2.bf16.msra.mxu0 0
    %584 = vmatprep.mubr.bf16.mxu0 0
    %585 = vmatmul.mubr.bf16.gmra.mxu0 %v551
    %v586 = vpop.f32.mrf.mxu0
    %v587 = vadd.f32 0.0, %v586
    %v588 = vpop.f32.mrf.mxu0
    %v589 = vadd.f32 0.0, %v588
    %v590 = vpop.f32.mrf.mxu0
    %v591 = vpop.f32.mrf.mxu0
    %592 = vdwg.mxu0
    %v593 = vadd.f32 %v550, %v243
    %v594 = vadd.f32 %v550, %v247
    %v595 = vadd.f32 %v593, %v587
    %v596 = vadd.f32 %v594, %v589
    %s597 = scalar_lea.vmem [#allocation9], 32
    %598 = vst [vmem:[%s597] sm:$0xff] %v595
    %599 = vst [vmem:[%s597 + $0x8] sm:$0xff] %v596
    %v600 = vmin.f32 %v595, %v596
    %601 = vmin.xlane.f32.xlu0 %v600
    %v602 = vpop.xlane.xlu0 %601
    %vm603 = vcmp.eq.f32.partialorder %v595, %v602
    %vm604 = vcmp.eq.f32.partialorder %v596, %v602
    %v605 = vsel %vm603, %v112, 256
    %v606 = vsel %vm604, %v113, 256
    %vm607 = vcmp.lt.s32.totalorder %v605, %v606
    %v608 = vsel %vm607, %v605, %v606
    %v609 = vand.u32 %v608, 65535
    %v610 = vshra.s32 %v608, 16
    %v611 = vcvt.s32.f32 %v609
    %v612 = vcvt.s32.f32 %v610
    %613 = vmin.xlane.f32.xlu0 %v612
    %v614 = vpop.xlane.xlu0 %613
    %vm615 = vcmp.eq.f32.partialorder %v612, %v614
    %v616 = vsel %vm615, %v611, inf
    %617 = vmin.xlane.f32.xlu0 %v616
    %v618 = vpop.xlane.xlu0 %617
    %v619 = vcvt.f32.s32 %v618
    %v620 = vcvt.f32.s32 %v614
    %v621 = vshll.u32 %v620, 16
    %v622 = vadd.s32 %v621, %v619
    %vm623 = vcmp.eq.s32.totalorder %v112, %v622
    %vm624 = vcmp.eq.s32.totalorder %v113, %v622
    %v625 = vsel %vm623, 1, 0
    %v626 = vsel %vm624, 1, 0
    %v627 = vcvt.s32.f32 %v625
    %v628 = vcvt.s32.f32 %v626
    %v629 = vpack.c.bf16 %v627, %v627
    %v630 = vpack.c.bf16 %v628, %v628
    %631 = vmatprep.subr.bf16.mxu0 0
    %632 = vmatpush1.bf16.msra.mxu0 %v358
    %633 = vmatprep.subr.bf16.mxu0 0
    %634 = vmatpush1.bf16.msra.mxu0 %v357
    %635 = vmatprep.subr.bf16.mxu0 0
    %636 = vmatpush1.bf16.msra.mxu0 %v356
    %637 = vmatprep.subr.bf16.mxu0 0
    %638 = vmatpush1.bf16.msra.mxu0 %v355
    %639 = vmatprep.subr.bf16.mxu0 0
    %640 = vmatpush1.bf16.msra.mxu0 %v354
    %641 = vmatprep.subr.bf16.mxu0 0
    %642 = vmatpush1.bf16.msra.mxu0 %v353
    %643 = vmatprep.subr.bf16.mxu0 0
    %644 = vmatpush1.bf16.msra.mxu0 %v352
    %645 = vmatprep.subr.bf16.mxu0 0
    %646 = vmatpush1.bf16.msra.mxu0 %v351
    %647 = vmatprep.subr.bf16.mxu0 0
    %648 = vmatpush2.bf16.msra.mxu0 %v366
    %649 = vmatprep.subr.bf16.mxu0 0
    %650 = vmatpush2.bf16.msra.mxu0 %v365
    %651 = vmatprep.subr.bf16.mxu0 0
    %652 = vmatpush2.bf16.msra.mxu0 %v364
    %653 = vmatprep.subr.bf16.mxu0 0
    %654 = vmatpush2.bf16.msra.mxu0 %v363
    %655 = vmatprep.subr.bf16.mxu0 0
    %656 = vmatpush2.bf16.msra.mxu0 %v362
    %657 = vmatprep.subr.bf16.mxu0 0
    %658 = vmatpush2.bf16.msra.mxu0 %v361
    %659 = vmatprep.subr.bf16.mxu0 0
    %660 = vmatpush2.bf16.msra.mxu0 %v360
    %661 = vmatprep.subr.bf16.mxu0 0
    %662 = vmatpush2.bf16.msra.mxu0 %v359
    %663 = vmatprep.mubr.bf16.mxu0 %v630
    %664 = vmatmul.mubr.bf16.gmra.mxu0 %v629
    %v665 = vpop.f32.mrf.mxu0
    %v666 = vadd.f32 0.0, %v665
    %v667 = vpop.f32.mrf.mxu0
    %v668 = vpop.f32.mrf.mxu0
    %v669 = vpop.f32.mrf.mxu0
    %670 = vdwg.mxu0
    %v671 = vsub.f32 %v547, %v666
    %v672 = vsub.f32 %v61, %v671
    %673 = vst [vmem:[#allocation8] sm:$0xff] %v672
    // Predicated region
    $region30: #{tpu_custom_call.1} parent=1 // pred_check
      _
    $region31: #{tpu_custom_call.1} parent=1 // pred_check_branch
      %675 = sbr.rel (0) target = $region33
    $region32: #{tpu_custom_call.1} parent=1 // pred_region
      %s677 = ssub.s32 128, 128
      %678 = vsyncadd [#allocation4], %s677
      %s680 = sshll.u32 [#allocation8], 4
      %s681 = int_to_ptr.vmem [resolvable:$true] %s680
      %683 = dma.vmem_to_hbm [thread:$0]  %s681, 128, %s4, [#allocation4]
    $region33: #{tpu_custom_call.1} parent=1 // pred_fallthru
      _
    // Predicated region
    $region34: #{tpu_custom_call.1} parent=1 // pred_check
      _
    $region35: #{tpu_custom_call.1} parent=1 // pred_check_branch
      %685 = sbr.rel (0) target = $region37
    $region36: #{tpu_custom_call.1} parent=1 // pred_region
      %s687 = ssub.s32 768, 768
      %688 = vsyncadd [#allocation10], %s687
      %s689 = sshll.u32 [#allocation9], 4
      %s690 = int_to_ptr.vmem [resolvable:$true] %s689
      %695 = dma.vmem_to_hbm [thread:$0]  %s690, 768, %s5, [#allocation10], 256, 256, 16
    $region37: #{tpu_custom_call.1} parent=1 // pred_fallthru
      _
    // Predicated region
    $region38: #{tpu_custom_call.1} parent=1 // pred_check
      _
    $region39: #{tpu_custom_call.1} parent=1 // pred_check_branch
      %697 = sbr.rel (0) target = $region41
    $region40: #{tpu_custom_call.1} parent=1 // pred_region
      %698 = dma.done [#allocation4], 128
    $region41: #{tpu_custom_call.1} parent=1 // pred_fallthru
      _
    // Predicated region
    $region42: #{tpu_custom_call.1} parent=1 // pred_check
      _
    $region43: #{tpu_custom_call.1} parent=1 // pred_check_branch
      %700 = sbr.rel (0) target = $region45
    $region44: #{tpu_custom_call.1} parent=1 // pred_region
      %701 = dma.done [#allocation10], 768
    $region45: #{tpu_custom_call.1} parent=1 // pred_fallthru
      _
    %702 = vsyncpa [#allocation3], 1
    %703 = vsyncpa [#allocation6], 1
    %704 = vsyncpa [#allocation4], 1
    %705 = vsyncpa [#allocation10], 1

</llo_original>
